<compile_context>
chip_gen: v7x
topology: tpu7x:2x2x1
jax: 0.10.0
libtpu: 0.0.40
codegen_flags: <defaults>
</compile_context>

<pallas_src>
import math

import jax
import jax.numpy as jnp
from jax import lax
from jax.experimental import pallas as pl
from jax.experimental.pallas import tpu as pltpu

# ----------------------- model hyper-parameters (static) -----------------------
NUM_IN = 16
NUM_LIF = 16
NUM_ALIF = 16
NUM_HID = NUM_LIF + NUM_ALIF
NUM_OUT = 8
MAX_DELAY = 4
REFRACTORY = 3

# physical / circuit constants (defaults from the PyTorch module)
RH = 100000.0
RS = 1500.0
RA = 100000.0
CMEM = 2e-07
CA = 7e-06
V_TH = 2.0
V_RESET = 0.5
VTN = 0.745
VTP = 0.973
KAPPA_N = 2.9e-05
KAPPA_P = 1.8e-05
WL_N = 6.0
WL_P = 4.0
VDD = 5.0
INPUT_SCALING = 0.00025
DT = 0.001
TAU_LP = 0.02

FACTOR = math.exp(-DT / (CMEM * (RH + RS)))     # membrane decay (LIF & ALIF)
FACTOR_VA = math.exp(-DT / (CA * RA))           # adaptation decay (ALIF)
FACTOR_LP = math.exp(-DT / TAU_LP)              # low-pass filter decay


def abs_id(kappa, w_over_l, vgs, vth, vds):
    # TODO(synk): absId() source is not provided in the reference; a standard
    # square-law MOSFET (cutoff / triode / saturation) model is used here.
    vov = jnp.maximum(vgs - vth, 0.0)
    vds_p = jnp.maximum(vds, 0.0)
    triode = kappa * w_over_l * (vov * vds_p - 0.5 * vds_p * vds_p)
    sat = 0.5 * kappa * w_over_l * vov * vov
    return jnp.where(vds_p < vov, triode, sat)


# --------------------------------- kernel ---------------------------------
def vo2_lsnn_kernel(ff_ref, wrc_ref, kn_ref, lp_out_ref,
                    rc_buf, y_st, v_st, va_st, ctr_st, lp_st):
    """Serial LIF/ALIF recurrence over one block of time steps.

    ff_ref:   [groups, Bs, G*H]  lane-packed, pre-scaled delayed fc1 drive
              (group g, lanes s*H:(s+1)*H = time step g*G+s)
    wrc_ref:  [H, MAX_DELAY*H]   lane-packed recurrent delayed weights (bf16, pre-scaled)
    kn_ref:   [1, H]             per-column kappa_n (0.0 for LIF columns -> Il masked)
    lp_out:   [groups, Bs, G*H]  lane-packed low-pass-filtered spikes (fc2 in wrapper)
    """
    tblk = pl.program_id(1)

    @pl.when(tblk == 0)
    def _init():
        rc_buf[...] = jnp.zeros_like(rc_buf)
        y_st[...] = jnp.zeros_like(y_st)
        v_st[...] = jnp.zeros_like(v_st)
        va_st[...] = jnp.zeros_like(va_st)
        ctr_st[...] = jnp.zeros_like(ctr_st)
        lp_st[...] = jnp.zeros_like(lp_st)

    n_groups = ff_ref.shape[0]
    b_dim, dh = rc_buf.shape
    h = y_st.shape[1]
    group = ff_ref.shape[2] // h                    # time steps packed per row

    # Loop-invariants hoisted out of the time loop.
    wrc = wrc_ref[...]                              # [H, D*H] bf16
    kn = kn_ref[...]                                # [1, H]
    keep = lax.broadcasted_iota(jnp.int32, (b_dim, dh), 1) < (dh - h)

    def group_step(g, carry):
        ff_grp = ff_ref[g]                          # [Bs, G*H] one lane-dense load
        lp_parts = []
        for s in range(group):                      # unrolled sub-steps of this group
            x_t = ff_grp[:, s * h:(s + 1) * h]      # [Bs, H] feed-forward drive
            y_prev = y_st[...]                      # previous hidden spikes

            # ---- recurrent DelayedLinear(H -> H): one fused bf16 matmul over all delays
            buf = rc_buf[...] + jnp.dot(y_prev.astype(jnp.bfloat16), wrc,
                                        preferred_element_type=jnp.float32)
            rc_out = buf[:, :h]                     # delay-0 slot
            # shift delay buffer one step: roll lanes by -H and zero the newest slot
            rc_buf[...] = jnp.where(keep, pltpu.roll(buf, shift=dh - h, axis=1), 0.0)

            lin = x_t + rc_out                      # [Bs, H] (already * INPUT_SCALING)
            v = v_st[...]
            va = va_st[...]
            ctr = ctr_st[...]

            # neuronal_reset (uses previous step's spikes)
            v = (1.0 - y_prev) * v + y_prev * V_RESET

            # neuronal_adapt (ALIF adaptation voltage; Il masked for LIF columns via kn)
            Ia = abs_id(KAPPA_P, WL_P, VDD * y_prev, VTP, VDD - va)
            va = FACTOR_VA * va + (1.0 - FACTOR_VA) * RA * Ia

            # refractory flag (state at entry of this step, before this step's spike)
            is_refr = ctr > 0.0

            # neuronal_charge (INPUT_SCALING folded into weights; kn == kappa_n * alif_mask)
            xr = jnp.maximum(lin, 0.0)
            Il = abs_id(kn, WL_N, va, VTN, v)
            v_new = FACTOR * v + (1.0 - FACTOR) * (RH + RS) * (xr - Il)
            v = jnp.where(is_refr, v, v_new)

            # neuronal_fire
            # TODO(synk): ScaledPiecewiseQuadratic surrogate source not provided; forward
            # pass assumed to be the usual heaviside (spike when v >= v_threshold).
            spike = jnp.where(is_refr, 0.0, (v >= V_TH).astype(jnp.float32))

            # refractory countdown counter (replaces the [REFRACTORY, B, H] ring buffer)
            ctr_st[...] = jnp.where(spike > 0.0, float(REFRACTORY),
                                    jnp.maximum(ctr - 1.0, 0.0))

            v_st[...] = v
            va_st[...] = va
            y_st[...] = spike

            # low-pass filter (leaky spike counter)
            lp = FACTOR_LP * lp_st[...] + (1.0 - FACTOR_LP) * spike
            lp_st[...] = lp
            lp_parts.append(lp)

        # one unmasked lane-dense 128-wide store per group of `group` steps
        lp_out_ref[g] = jnp.concatenate(lp_parts, axis=1)
        return carry

    lax.fori_loop(0, n_groups, group_step, 0, unroll=2)


# --------------------------------- wrapper ---------------------------------
def vo2_lsnn_forward(x_btn, w1, wrc, w2, alif_mask, *, t_block=1024, batch_shards=1):
    """x_btn: [B, T, num_in] -> returns [T, B, num_out] (same as the PyTorch module).

    w1:  [MAX_DELAY, num_in, H]   delay-masked, pre-transposed fc1 weights
    wrc: [MAX_DELAY, H, H]        delay-masked, pre-transposed recurrent weights
    w2:  [H, num_out]             fc2 weights (pre-transposed), bias=False

    batch_shards: leading "parallel" grid axis (v7x megacore). Only useful when the
    per-shard batch is still a multiple of 8 sublanes; leave at 1 for small B
    (the recurrence is latency-bound, so sequential shards on 1-TC chips only hurt).
    """
    B, T, n_in = x_btn.shape
    D, _, H = w1.shape
    n_out = w2.shape[1]

    # lane-dense packing factor: pack `group` consecutive steps into 128 lanes
    group = 128 // H if (H <= 128 and 128 % H == 0) else 1

    x_tbn = jnp.transpose(x_btn, (1, 0, 2)).astype(jnp.float32)       # [T, B, n_in]
    # fold INPUT_SCALING into the feed-forward / recurrent weights (commutes through relu)
    w1s = (INPUT_SCALING * w1).astype(jnp.float32)                    # [D, n_in, H]
    wrcs = (INPUT_SCALING * wrc).astype(jnp.float32)                  # [D, H, H]
    w2 = w2.astype(jnp.float32)

    # ---- hoisted fc1: ff[t] = sum_d x[t-d] @ W1_d as ONE fused einsum (no RMW loop) ----
    x_pad = jnp.pad(x_tbn, ((D - 1, 0), (0, 0), (0, 0)))              # zeros for t-d < 0
    shifted = jnp.stack([x_pad[D - 1 - d: D - 1 - d + T] for d in range(D)],
                        axis=2)                                       # [T, B, D, n_in]
    ff = jnp.einsum('tbdi,dih->tbh', shifted, w1s)                    # [T, B, H]

    # ---- lane-packed recurrent weight: [D, H, H] -> [H, D*H], bf16 for the MXU ----
    wrc_all = jnp.transpose(wrcs, (1, 0, 2)).reshape(H, D * H).astype(jnp.bfloat16)

    # ---- per-column kappa_n (zeros Il for LIF columns) ----
    kn = (KAPPA_N * alif_mask.astype(jnp.float32)).reshape(1, H)

    # ---- pad time to a block multiple and lane-pack `group` steps per row ----
    t_grp = ((T + group - 1) // group) * group
    tb = max(group, min(int(t_block) // group * group, t_grp))
    T_pad = ((T + tb - 1) // tb) * tb
    if T_pad > T:
        ff = jnp.concatenate([ff, jnp.zeros((T_pad - T, B, H), jnp.float32)], axis=0)
    n_grp = T_pad // group
    ff_packed = jnp.transpose(ff.reshape(n_grp, group, B, H),
                              (0, 2, 1, 3)).reshape(n_grp, B, group * H)

    nb = max(1, int(batch_shards))
    assert B % nb == 0, "batch must divide evenly into batch_shards"
    Bs = B // nb
    gpb = tb // group                                                  # groups per block

    lp_packed = pl.pallas_call(
        vo2_lsnn_kernel,
        out_shape=jax.ShapeDtypeStruct((n_grp, B, group * H), jnp.float32),
        grid_spec=pltpu.PrefetchScalarGridSpec(
            num_scalar_prefetch=0,
            grid=(nb, T_pad // tb),
            in_specs=[
                pl.BlockSpec((gpb, Bs, group * H), lambda b, i: (i, b, 0)),  # ff drive
                pl.BlockSpec((H, D * H), lambda b, i: (0, 0)),               # rc weights
                pl.BlockSpec((1, H), lambda b, i: (0, 0)),                   # kappa_n cols
            ],
            out_specs=pl.BlockSpec((gpb, Bs, group * H), lambda b, i: (i, b, 0)),
            scratch_shapes=[
                pltpu.VMEM((Bs, D * H), jnp.float32),   # lane-packed recurrent delay buf
                pltpu.VMEM((Bs, H), jnp.float32),       # previous spikes (y)
                pltpu.VMEM((Bs, H), jnp.float32),       # membrane voltage v
                pltpu.VMEM((Bs, H), jnp.float32),       # adaptation voltage va
                pltpu.VMEM((Bs, H), jnp.float32),       # refractory countdown counter
                pltpu.VMEM((Bs, H), jnp.float32),       # low-pass filter state
            ],
        ),
        compiler_params=pltpu.CompilerParams(
            dimension_semantics=("parallel", "arbitrary"),
            vmem_limit_bytes=32 * 1024 * 1024),
    )(ff_packed, wrc_all, kn)

    # unpack lane-dense output back to [T, B, H]
    lp_seq = jnp.transpose(lp_packed.reshape(n_grp, B, group, H),
                           (0, 2, 1, 3)).reshape(T_pad, B, H)[:T]
    # ---- hoisted fc2 readout: one big lane-dense matmul instead of T tiny ones ----
    return jnp.einsum('tbh,ho->tbo', lp_seq, w2)


# ------------------------ deterministic parameter setup ------------------------
def make_delayed_weight(key, in_f, out_f, max_delay, diag_disconnect=False):
    """Returns stacked, delay-masked, pre-transposed weight: [max_delay, in_f, out_f]."""
    kw, kd = jax.random.split(key)
    std = 1.0 / math.sqrt(in_f)                               # custom_reset_parameters(1,1)
    w = std * jax.random.normal(kw, (out_f, in_f), dtype=jnp.float32)
    if diag_disconnect:
        w = jnp.where(jnp.eye(in_f, dtype=bool), 0.0, w)
    delays = jax.random.randint(kd, (out_f, in_f), 0, max_delay)
    stack = [jnp.where(delays == d, w, 0.0).T for d in range(max_delay)]  # each [in, out]
    return jnp.stack(stack, axis=0)


if __name__ == "__main__":
    B, T = 2, 8
    key = jax.random.PRNGKey(0)
    k1, k2, k3, kx = jax.random.split(key, 4)

    w1 = make_delayed_weight(k1, NUM_IN, NUM_HID, MAX_DELAY)                          # fc1
    wrc = make_delayed_weight(k2, NUM_HID, NUM_HID, MAX_DELAY, diag_disconnect=True)  # rc
    bound = 1.0 / math.sqrt(NUM_HID)
    w2 = jax.random.uniform(k3, (NUM_HID, NUM_OUT), jnp.float32, -bound, bound)       # fc2
    alif_mask = jnp.concatenate(
        [jnp.zeros((NUM_LIF,), jnp.float32), jnp.ones((NUM_ALIF,), jnp.float32)]
    ).reshape(1, NUM_HID)

    # inputs scaled up so that some neurons actually cross threshold
    x = 20.0 * jax.random.normal(kx, (B, T, NUM_IN), dtype=jnp.float32)

    out = vo2_lsnn_forward(x, w1, wrc, w2, alif_mask)
    jax.block_until_ready(out)
    assert out.shape == (T, B, NUM_OUT)
    print("KERNEL_OK")
</pallas_src>

<mosaic_0001>
module attributes {stable_mosaic.version = 11 : i64} {
  func.func @vo2_lsnn_kernel(%arg0: i32, %arg1: i32, %arg2: memref<2x2x128xf32, #tpu.memory_space<vmem>>, %arg3: memref<32x128xbf16, #tpu.memory_space<vmem>>, %arg4: memref<1x32xf32, #tpu.memory_space<vmem>>, %arg5: memref<2x2x128xf32, #tpu.memory_space<vmem>>, %arg6: memref<2x128xf32, #tpu.memory_space<vmem>>, %arg7: memref<2x32xf32, #tpu.memory_space<vmem>>, %arg8: memref<2x32xf32, #tpu.memory_space<vmem>>, %arg9: memref<2x32xf32, #tpu.memory_space<vmem>>, %arg10: memref<2x32xf32, #tpu.memory_space<vmem>>, %arg11: memref<2x32xf32, #tpu.memory_space<vmem>>) attributes {dimension_semantics = [#tpu.dimension_semantics<parallel>, #tpu.dimension_semantics<arbitrary>], iteration_bounds = array<i64: 1, 1>, scalar_prefetch = 0 : i64, scratch_operands = 6 : i64, tpu.core_type = #tpu.core_type<tc>, window_params = [{transform_indices = @transform_0, window_bounds = array<i64: 2, 2, 128>}, {pipeline_mode = #tpu.pipeline_mode<synchronous>, transform_indices = @transform_1, window_bounds = array<i64: 32, 128>}, {pipeline_mode = #tpu.pipeline_mode<synchronous>, transform_indices = @transform_2, window_bounds = array<i64: 1, 32>}, {transform_indices = @transform_3, window_bounds = array<i64: 2, 2, 128>}]} {
    %c0_i32 = arith.constant 0 : i32
    %0 = arith.cmpi eq, %arg1, %c0_i32 : i32
    %1 = arith.extui %0 : i1 to i32
    %c0_i32_0 = arith.constant 0 : i32
    %2 = arith.cmpi ne, %1, %c0_i32_0 : i32
    scf.if %2 {
      %cst_476 = arith.constant 0.000000e+00 : f32
      %888 = vector.broadcast %cst_476 : f32 to vector<2x128xf32>
      %c0_477 = arith.constant 0 : index
      %c0_478 = arith.constant 0 : index
      %889 = vector.load %arg6[%c0_477, %c0_478] : memref<2x128xf32, #tpu.memory_space<vmem>>, vector<2x128xf32>
      tpu.vector_store %arg6[%c0_477, %c0_478], %888 {strides = array<i32>} : memref<2x128xf32, #tpu.memory_space<vmem>>, vector<2x128xf32>,
      %cst_479 = arith.constant 0.000000e+00 : f32
      %890 = vector.broadcast %cst_479 : f32 to vector<2x32xf32>
      %c0_480 = arith.constant 0 : index
      %c0_481 = arith.constant 0 : index
      %891 = vector.load %arg7[%c0_480, %c0_481] : memref<2x32xf32, #tpu.memory_space<vmem>>, vector<2x32xf32>
      tpu.vector_store %arg7[%c0_480, %c0_481], %890 {strides = array<i32>} : memref<2x32xf32, #tpu.memory_space<vmem>>, vector<2x32xf32>,
      %cst_482 = arith.constant 0.000000e+00 : f32
      %892 = vector.broadcast %cst_482 : f32 to vector<2x32xf32>
      %c0_483 = arith.constant 0 : index
      %c0_484 = arith.constant 0 : index
      %893 = vector.load %arg8[%c0_483, %c0_484] : memref<2x32xf32, #tpu.memory_space<vmem>>, vector<2x32xf32>
      tpu.vector_store %arg8[%c0_483, %c0_484], %892 {strides = array<i32>} : memref<2x32xf32, #tpu.memory_space<vmem>>, vector<2x32xf32>,
      %cst_485 = arith.constant 0.000000e+00 : f32
      %894 = vector.broadcast %cst_485 : f32 to vector<2x32xf32>
      %c0_486 = arith.constant 0 : index
      %c0_487 = arith.constant 0 : index
      %895 = vector.load %arg9[%c0_486, %c0_487] : memref<2x32xf32, #tpu.memory_space<vmem>>, vector<2x32xf32>
      tpu.vector_store %arg9[%c0_486, %c0_487], %894 {strides = array<i32>} : memref<2x32xf32, #tpu.memory_space<vmem>>, vector<2x32xf32>,
      %cst_488 = arith.constant 0.000000e+00 : f32
      %896 = vector.broadcast %cst_488 : f32 to vector<2x32xf32>
      %c0_489 = arith.constant 0 : index
      %c0_490 = arith.constant 0 : index
      %897 = vector.load %arg10[%c0_489, %c0_490] : memref<2x32xf32, #tpu.memory_space<vmem>>, vector<2x32xf32>
      tpu.vector_store %arg10[%c0_489, %c0_490], %896 {strides = array<i32>} : memref<2x32xf32, #tpu.memory_space<vmem>>, vector<2x32xf32>,
      %cst_491 = arith.constant 0.000000e+00 : f32
      %898 = vector.broadcast %cst_491 : f32 to vector<2x32xf32>
      %c0_492 = arith.constant 0 : index
      %c0_493 = arith.constant 0 : index
      %899 = vector.load %arg11[%c0_492, %c0_493] : memref<2x32xf32, #tpu.memory_space<vmem>>, vector<2x32xf32>
      tpu.vector_store %arg11[%c0_492, %c0_493], %898 {strides = array<i32>} : memref<2x32xf32, #tpu.memory_space<vmem>>, vector<2x32xf32>,
    } else {
    }
    %c0 = arith.constant 0 : index
    %c0_1 = arith.constant 0 : index
    %3 = vector.load %arg3[%c0, %c0_1] : memref<32x128xbf16, #tpu.memory_space<vmem>>, vector<32x128xbf16>
    %c0_2 = arith.constant 0 : index
    %c0_3 = arith.constant 0 : index
    %4 = vector.load %arg4[%c0_2, %c0_3] : memref<1x32xf32, #tpu.memory_space<vmem>>, vector<1x32xf32>
    %5 = tpu.iota {dimensions = array<i32: 1>} : vector<2x128xi32>
    %c96_i32 = arith.constant 96 : i32
    %6 = vector.broadcast %c96_i32 : i32 to vector<2x128xi32>
    %7 = arith.cmpi slt, %5, %6 : vector<2x128xi32>
    %c0_i32_4 = arith.constant 0 : i32
    %8 = arith.index_cast %c0_i32_4 : i32 to index
    %c0_5 = arith.constant 0 : index
    %c0_6 = arith.constant 0 : index
    %9 = vector.load %arg2[%8, %c0_5, %c0_6] : memref<2x2x128xf32, #tpu.memory_space<vmem>>, vector<1x2x128xf32>
    %10 = vector.shape_cast %9 : vector<1x2x128xf32> to vector<2x128xf32>
    %11 = vector.extract_strided_slice %10 {offsets = [0, 0], sizes = [2, 32], strides = [1, 1]} : vector<2x128xf32> to vector<2x32xf32>
    %c0_7 = arith.constant 0 : index
    %c0_8 = arith.constant 0 : index
    %12 = vector.load %arg7[%c0_7, %c0_8] : memref<2x32xf32, #tpu.memory_space<vmem>>, vector<2x32xf32>
    %c0_9 = arith.constant 0 : index
    %c0_10 = arith.constant 0 : index
    %13 = vector.load %arg6[%c0_9, %c0_10] : memref<2x128xf32, #tpu.memory_space<vmem>>, vector<2x128xf32>
    %14 = arith.truncf %12 : vector<2x32xf32> to vector<2x32xbf16>
    %cst = arith.constant dense<0.000000e+00> : vector<2x128xf32>
    %15 = tpu.matmul %14, %3, %cst {dimension_numbers = #tpu.dot_dimension_numbers<[1], [0], [0], [1], [0, 0, 1, 1], [], []>} : vector<2x32xbf16>, vector<32x128xbf16>, vector<2x128xf32> -> vector<2x128xf32>
    %16 = arith.addf %13, %15 : vector<2x128xf32>
    %17 = vector.extract_strided_slice %16 {offsets = [0, 0], sizes = [2, 32], strides = [1, 1]} : vector<2x128xf32> to vector<2x32xf32>
    %c96_i32_11 = arith.constant 96 : i32
    %18 = tpu.dynamic_rotate %16 by %c96_i32_11 dim 1 : vector<2x128xf32>, i32 -> vector<2x128xf32>
    %cst_12 = arith.constant 0.000000e+00 : f32
    %19 = vector.broadcast %cst_12 : f32 to vector<2x128xf32>
    %20 = arith.select %7, %18, %19 : vector<2x128xi1>, vector<2x128xf32>
    %c0_13 = arith.constant 0 : index
    %c0_14 = arith.constant 0 : index
    %21 = vector.load %arg6[%c0_13, %c0_14] : memref<2x128xf32, #tpu.memory_space<vmem>>, vector<2x128xf32>
    tpu.vector_store %arg6[%c0_13, %c0_14], %20 {strides = array<i32>} : memref<2x128xf32, #tpu.memory_space<vmem>>, vector<2x128xf32>,
    %22 = arith.addf %11, %17 : vector<2x32xf32>
    %c0_15 = arith.constant 0 : index
    %c0_16 = arith.constant 0 : index
    %23 = vector.load %arg8[%c0_15, %c0_16] : memref<2x32xf32, #tpu.memory_space<vmem>>, vector<2x32xf32>
    %c0_17 = arith.constant 0 : index
    %c0_18 = arith.constant 0 : index
    %24 = vector.load %arg9[%c0_17, %c0_18] : memref<2x32xf32, #tpu.memory_space<vmem>>, vector<2x32xf32>
    %c0_19 = arith.constant 0 : index
    %c0_20 = arith.constant 0 : index
    %25 = vector.load %arg10[%c0_19, %c0_20] : memref<2x32xf32, #tpu.memory_space<vmem>>, vector<2x32xf32>
    %cst_21 = arith.constant 1.000000e+00 : f32
    %26 = vector.broadcast %cst_21 : f32 to vector<2x32xf32>
    %27 = arith.subf %26, %12 : vector<2x32xf32>
    %28 = arith.mulf %27, %23 : vector<2x32xf32>
    %cst_22 = arith.constant 5.000000e-01 : f32
    %29 = vector.broadcast %cst_22 : f32 to vector<2x32xf32>
    %30 = arith.mulf %12, %29 : vector<2x32xf32>
    %31 = arith.addf %28, %30 : vector<2x32xf32>
    %cst_23 = arith.constant 5.000000e+00 : f32
    %32 = vector.broadcast %cst_23 : f32 to vector<2x32xf32>
    %33 = arith.mulf %32, %12 : vector<2x32xf32>
    %cst_24 = arith.constant 5.000000e+00 : f32
    %34 = vector.broadcast %cst_24 : f32 to vector<2x32xf32>
    %35 = arith.subf %34, %24 : vector<2x32xf32>
    %cst_25 = arith.constant 0.972999989 : f32
    %36 = vector.broadcast %cst_25 : f32 to vector<2x32xf32>
    %37 = arith.subf %33, %36 : vector<2x32xf32>
    %cst_26 = arith.constant 0.000000e+00 : f32
    %38 = vector.broadcast %cst_26 : f32 to vector<2x32xf32>
    %39 = arith.maximumf %37, %38 : vector<2x32xf32>
    %cst_27 = arith.constant 0.000000e+00 : f32
    %40 = vector.broadcast %cst_27 : f32 to vector<2x32xf32>
    %41 = arith.maximumf %35, %40 : vector<2x32xf32>
    %42 = arith.mulf %39, %41 : vector<2x32xf32>
    %cst_28 = arith.constant 5.000000e-01 : f32
    %43 = vector.broadcast %cst_28 : f32 to vector<2x32xf32>
    %44 = arith.mulf %43, %41 : vector<2x32xf32>
    %45 = arith.mulf %44, %41 : vector<2x32xf32>
    %46 = arith.subf %42, %45 : vector<2x32xf32>
    %cst_29 = arith.constant 7.200000e-05 : f32
    %47 = vector.broadcast %cst_29 : f32 to vector<2x32xf32>
    %48 = arith.mulf %47, %46 : vector<2x32xf32>
    %cst_30 = arith.constant 3.600000e-05 : f32
    %49 = vector.broadcast %cst_30 : f32 to vector<2x32xf32>
    %50 = arith.mulf %49, %39 : vector<2x32xf32>
    %51 = arith.mulf %50, %39 : vector<2x32xf32>
    %52 = arith.cmpf olt, %41, %39 : vector<2x32xf32>
    %53 = arith.select %52, %48, %51 : vector<2x32xi1>, vector<2x32xf32>
    %cst_31 = arith.constant 0.998572468 : f32
    %54 = vector.broadcast %cst_31 : f32 to vector<2x32xf32>
    %55 = arith.mulf %54, %24 : vector<2x32xf32>
    %cst_32 = arith.constant 142.755157 : f32
    %56 = vector.broadcast %cst_32 : f32 to vector<2x32xf32>
    %57 = arith.mulf %56, %53 : vector<2x32xf32>
    %58 = arith.addf %55, %57 : vector<2x32xf32>
    %cst_33 = arith.constant 0.000000e+00 : f32
    %59 = vector.broadcast %cst_33 : f32 to vector<2x32xf32>
    %60 = arith.cmpf ogt, %25, %59 : vector<2x32xf32>
    %cst_34 = arith.constant 0.000000e+00 : f32
    %61 = vector.broadcast %cst_34 : f32 to vector<2x32xf32>
    %62 = arith.maximumf %22, %61 : vector<2x32xf32>
    %cst_35 = arith.constant 7.450000e-01 : f32
    %63 = vector.broadcast %cst_35 : f32 to vector<2x32xf32>
    %64 = arith.subf %58, %63 : vector<2x32xf32>
    %cst_36 = arith.constant 0.000000e+00 : f32
    %65 = vector.broadcast %cst_36 : f32 to vector<2x32xf32>
    %66 = arith.maximumf %64, %65 : vector<2x32xf32>
    %cst_37 = arith.constant 0.000000e+00 : f32
    %67 = vector.broadcast %cst_37 : f32 to vector<2x32xf32>
    %68 = arith.maximumf %31, %67 : vector<2x32xf32>
    %cst_38 = arith.constant 6.000000e+00 : f32
    %69 = vector.broadcast %cst_38 : f32 to vector<1x32xf32>
    %70 = arith.mulf %4, %69 : vector<1x32xf32>
    %71 = arith.mulf %66, %68 : vector<2x32xf32>
    %cst_39 = arith.constant 5.000000e-01 : f32
    %72 = vector.broadcast %cst_39 : f32 to vector<2x32xf32>
    %73 = arith.mulf %72, %68 : vector<2x32xf32>
    %74 = arith.mulf %73, %68 : vector<2x32xf32>
    %75 = arith.subf %71, %74 : vector<2x32xf32>
    %76 = vector.broadcast %70 : vector<1x32xf32> to vector<2x32xf32>
    %77 = arith.mulf %76, %75 : vector<2x32xf32>
    %cst_40 = arith.constant 5.000000e-01 : f32
    %78 = vector.broadcast %cst_40 : f32 to vector<1x32xf32>
    %79 = arith.mulf %78, %4 : vector<1x32xf32>
    %cst_41 = arith.constant 6.000000e+00 : f32
    %80 = vector.broadcast %cst_41 : f32 to vector<1x32xf32>
    %81 = arith.mulf %79, %80 : vector<1x32xf32>
    %82 = vector.broadcast %81 : vector<1x32xf32> to vector<2x32xf32>
    %83 = arith.mulf %82, %66 : vector<2x32xf32>
    %84 = arith.mulf %83, %66 : vector<2x32xf32>
    %85 = arith.cmpf olt, %68, %66 : vector<2x32xf32>
    %86 = arith.select %85, %77, %84 : vector<2x32xi1>, vector<2x32xf32>
    %cst_42 = arith.constant 0.951932549 : f32
    %87 = vector.broadcast %cst_42 : f32 to vector<2x32xf32>
    %88 = arith.mulf %87, %31 : vector<2x32xf32>
    %89 = arith.subf %62, %86 : vector<2x32xf32>
    %cst_43 = arith.constant 4878.84473 : f32
    %90 = vector.broadcast %cst_43 : f32 to vector<2x32xf32>
    %91 = arith.mulf %90, %89 : vector<2x32xf32>
    %92 = arith.addf %88, %91 : vector<2x32xf32>
    %93 = arith.select %60, %31, %92 : vector<2x32xi1>, vector<2x32xf32>
    %cst_44 = arith.constant 2.000000e+00 : f32
    %94 = vector.broadcast %cst_44 : f32 to vector<2x32xf32>
    %95 = arith.cmpf oge, %93, %94 : vector<2x32xf32>
    %96 = arith.extui %95 : vector<2x32xi1> to vector<2x32xi32>
    %97 = arith.sitofp %96 : vector<2x32xi32> to vector<2x32xf32>
    %cst_45 = arith.constant 0.000000e+00 : f32
    %98 = vector.broadcast %cst_45 : f32 to vector<2x32xf32>
    %99 = arith.select %60, %98, %97 : vector<2x32xi1>, vector<2x32xf32>
    %cst_46 = arith.constant 0.000000e+00 : f32
    %100 = vector.broadcast %cst_46 : f32 to vector<2x32xf32>
    %101 = arith.cmpf ogt, %99, %100 : vector<2x32xf32>
    %cst_47 = arith.constant 1.000000e+00 : f32
    %102 = vector.broadcast %cst_47 : f32 to vector<2x32xf32>
    %103 = arith.subf %25, %102 : vector<2x32xf32>
    %cst_48 = arith.constant 0.000000e+00 : f32
    %104 = vector.broadcast %cst_48 : f32 to vector<2x32xf32>
    %105 = arith.maximumf %103, %104 : vector<2x32xf32>
    %cst_49 = arith.constant 3.000000e+00 : f32
    %106 = vector.broadcast %cst_49 : f32 to vector<2x32xf32>
    %107 = arith.select %101, %106, %105 : vector<2x32xi1>, vector<2x32xf32>
    %c0_50 = arith.constant 0 : index
    %c0_51 = arith.constant 0 : index
    %108 = vector.load %arg10[%c0_50, %c0_51] : memref<2x32xf32, #tpu.memory_space<vmem>>, vector<2x32xf32>
    tpu.vector_store %arg10[%c0_50, %c0_51], %107 {strides = array<i32>} : memref<2x32xf32, #tpu.memory_space<vmem>>, vector<2x32xf32>,
    %c0_52 = arith.constant 0 : index
    %c0_53 = arith.constant 0 : index
    %109 = vector.load %arg8[%c0_52, %c0_53] : memref<2x32xf32, #tpu.memory_space<vmem>>, vector<2x32xf32>
    tpu.vector_store %arg8[%c0_52, %c0_53], %93 {strides = array<i32>} : memref<2x32xf32, #tpu.memory_space<vmem>>, vector<2x32xf32>,
    %c0_54 = arith.constant 0 : index
    %c0_55 = arith.constant 0 : index
    %110 = vector.load %arg9[%c0_54, %c0_55] : memref<2x32xf32, #tpu.memory_space<vmem>>, vector<2x32xf32>
    tpu.vector_store %arg9[%c0_54, %c0_55], %58 {strides = array<i32>} : memref<2x32xf32, #tpu.memory_space<vmem>>, vector<2x32xf32>,
    %c0_56 = arith.constant 0 : index
    %c0_57 = arith.constant 0 : index
    %111 = vector.load %arg7[%c0_56, %c0_57] : memref<2x32xf32, #tpu.memory_space<vmem>>, vector<2x32xf32>
    tpu.vector_store %arg7[%c0_56, %c0_57], %99 {strides = array<i32>} : memref<2x32xf32, #tpu.memory_space<vmem>>, vector<2x32xf32>,
    %c0_58 = arith.constant 0 : index
    %c0_59 = arith.constant 0 : index
    %112 = vector.load %arg11[%c0_58, %c0_59] : memref<2x32xf32, #tpu.memory_space<vmem>>, vector<2x32xf32>
    %cst_60 = arith.constant 0.951229453 : f32
    %113 = vector.broadcast %cst_60 : f32 to vector<2x32xf32>
    %114 = arith.mulf %113, %112 : vector<2x32xf32>
    %cst_61 = arith.constant 0.0487705767 : f32
    %115 = vector.broadcast %cst_61 : f32 to vector<2x32xf32>
    %116 = arith.mulf %115, %99 : vector<2x32xf32>
    %117 = arith.addf %114, %116 : vector<2x32xf32>
    %c0_62 = arith.constant 0 : index
    %c0_63 = arith.constant 0 : index
    %118 = vector.load %arg11[%c0_62, %c0_63] : memref<2x32xf32, #tpu.memory_space<vmem>>, vector<2x32xf32>
    tpu.vector_store %arg11[%c0_62, %c0_63], %117 {strides = array<i32>} : memref<2x32xf32, #tpu.memory_space<vmem>>, vector<2x32xf32>,
    %119 = vector.extract_strided_slice %10 {offsets = [0, 32], sizes = [2, 32], strides = [1, 1]} : vector<2x128xf32> to vector<2x32xf32>
    %c0_64 = arith.constant 0 : index
    %c0_65 = arith.constant 0 : index
    %120 = vector.load %arg7[%c0_64, %c0_65] : memref<2x32xf32, #tpu.memory_space<vmem>>, vector<2x32xf32>
    %c0_66 = arith.constant 0 : index
    %c0_67 = arith.constant 0 : index
    %121 = vector.load %arg6[%c0_66, %c0_67] : memref<2x128xf32, #tpu.memory_space<vmem>>, vector<2x128xf32>
    %122 = arith.truncf %120 : vector<2x32xf32> to vector<2x32xbf16>
    %cst_68 = arith.constant dense<0.000000e+00> : vector<2x128xf32>
    %123 = tpu.matmul %122, %3, %cst_68 {dimension_numbers = #tpu.dot_dimension_numbers<[1], [0], [0], [1], [0, 0, 1, 1], [], []>} : vector<2x32xbf16>, vector<32x128xbf16>, vector<2x128xf32> -> vector<2x128xf32>
    %124 = arith.addf %121, %123 : vector<2x128xf32>
    %125 = vector.extract_strided_slice %124 {offsets = [0, 0], sizes = [2, 32], strides = [1, 1]} : vector<2x128xf32> to vector<2x32xf32>
    %c96_i32_69 = arith.constant 96 : i32
    %126 = tpu.dynamic_rotate %124 by %c96_i32_69 dim 1 : vector<2x128xf32>, i32 -> vector<2x128xf32>
    %cst_70 = arith.constant 0.000000e+00 : f32
    %127 = vector.broadcast %cst_70 : f32 to vector<2x128xf32>
    %128 = arith.select %7, %126, %127 : vector<2x128xi1>, vector<2x128xf32>
    %c0_71 = arith.constant 0 : index
    %c0_72 = arith.constant 0 : index
    %129 = vector.load %arg6[%c0_71, %c0_72] : memref<2x128xf32, #tpu.memory_space<vmem>>, vector<2x128xf32>
    tpu.vector_store %arg6[%c0_71, %c0_72], %128 {strides = array<i32>} : memref<2x128xf32, #tpu.memory_space<vmem>>, vector<2x128xf32>,
    %130 = arith.addf %119, %125 : vector<2x32xf32>
    %c0_73 = arith.constant 0 : index
    %c0_74 = arith.constant 0 : index
    %131 = vector.load %arg8[%c0_73, %c0_74] : memref<2x32xf32, #tpu.memory_space<vmem>>, vector<2x32xf32>
    %c0_75 = arith.constant 0 : index
    %c0_76 = arith.constant 0 : index
    %132 = vector.load %arg9[%c0_75, %c0_76] : memref<2x32xf32, #tpu.memory_space<vmem>>, vector<2x32xf32>
    %c0_77 = arith.constant 0 : index
    %c0_78 = arith.constant 0 : index
    %133 = vector.load %arg10[%c0_77, %c0_78] : memref<2x32xf32, #tpu.memory_space<vmem>>, vector<2x32xf32>
    %cst_79 = arith.constant 1.000000e+00 : f32
    %134 = vector.broadcast %cst_79 : f32 to vector<2x32xf32>
    %135 = arith.subf %134, %120 : vector<2x32xf32>
    %136 = arith.mulf %135, %131 : vector<2x32xf32>
    %cst_80 = arith.constant 5.000000e-01 : f32
    %137 = vector.broadcast %cst_80 : f32 to vector<2x32xf32>
    %138 = arith.mulf %120, %137 : vector<2x32xf32>
    %139 = arith.addf %136, %138 : vector<2x32xf32>
    %cst_81 = arith.constant 5.000000e+00 : f32
    %140 = vector.broadcast %cst_81 : f32 to vector<2x32xf32>
    %141 = arith.mulf %140, %120 : vector<2x32xf32>
    %cst_82 = arith.constant 5.000000e+00 : f32
    %142 = vector.broadcast %cst_82 : f32 to vector<2x32xf32>
    %143 = arith.subf %142, %132 : vector<2x32xf32>
    %cst_83 = arith.constant 0.972999989 : f32
    %144 = vector.broadcast %cst_83 : f32 to vector<2x32xf32>
    %145 = arith.subf %141, %144 : vector<2x32xf32>
    %cst_84 = arith.constant 0.000000e+00 : f32
    %146 = vector.broadcast %cst_84 : f32 to vector<2x32xf32>
    %147 = arith.maximumf %145, %146 : vector<2x32xf32>
    %cst_85 = arith.constant 0.000000e+00 : f32
    %148 = vector.broadcast %cst_85 : f32 to vector<2x32xf32>
    %149 = arith.maximumf %143, %148 : vector<2x32xf32>
    %150 = arith.mulf %147, %149 : vector<2x32xf32>
    %cst_86 = arith.constant 5.000000e-01 : f32
    %151 = vector.broadcast %cst_86 : f32 to vector<2x32xf32>
    %152 = arith.mulf %151, %149 : vector<2x32xf32>
    %153 = arith.mulf %152, %149 : vector<2x32xf32>
    %154 = arith.subf %150, %153 : vector<2x32xf32>
    %cst_87 = arith.constant 7.200000e-05 : f32
    %155 = vector.broadcast %cst_87 : f32 to vector<2x32xf32>
    %156 = arith.mulf %155, %154 : vector<2x32xf32>
    %cst_88 = arith.constant 3.600000e-05 : f32
    %157 = vector.broadcast %cst_88 : f32 to vector<2x32xf32>
    %158 = arith.mulf %157, %147 : vector<2x32xf32>
    %159 = arith.mulf %158, %147 : vector<2x32xf32>
    %160 = arith.cmpf olt, %149, %147 : vector<2x32xf32>
    %161 = arith.select %160, %156, %159 : vector<2x32xi1>, vector<2x32xf32>
    %cst_89 = arith.constant 0.998572468 : f32
    %162 = vector.broadcast %cst_89 : f32 to vector<2x32xf32>
    %163 = arith.mulf %162, %132 : vector<2x32xf32>
    %cst_90 = arith.constant 142.755157 : f32
    %164 = vector.broadcast %cst_90 : f32 to vector<2x32xf32>
    %165 = arith.mulf %164, %161 : vector<2x32xf32>
    %166 = arith.addf %163, %165 : vector<2x32xf32>
    %cst_91 = arith.constant 0.000000e+00 : f32
    %167 = vector.broadcast %cst_91 : f32 to vector<2x32xf32>
    %168 = arith.cmpf ogt, %133, %167 : vector<2x32xf32>
    %cst_92 = arith.constant 0.000000e+00 : f32
    %169 = vector.broadcast %cst_92 : f32 to vector<2x32xf32>
    %170 = arith.maximumf %130, %169 : vector<2x32xf32>
    %cst_93 = arith.constant 7.450000e-01 : f32
    %171 = vector.broadcast %cst_93 : f32 to vector<2x32xf32>
    %172 = arith.subf %166, %171 : vector<2x32xf32>
    %cst_94 = arith.constant 0.000000e+00 : f32
    %173 = vector.broadcast %cst_94 : f32 to vector<2x32xf32>
    %174 = arith.maximumf %172, %173 : vector<2x32xf32>
    %cst_95 = arith.constant 0.000000e+00 : f32
    %175 = vector.broadcast %cst_95 : f32 to vector<2x32xf32>
    %176 = arith.maximumf %139, %175 : vector<2x32xf32>
    %cst_96 = arith.constant 6.000000e+00 : f32
    %177 = vector.broadcast %cst_96 : f32 to vector<1x32xf32>
    %178 = arith.mulf %4, %177 : vector<1x32xf32>
    %179 = arith.mulf %174, %176 : vector<2x32xf32>
    %cst_97 = arith.constant 5.000000e-01 : f32
    %180 = vector.broadcast %cst_97 : f32 to vector<2x32xf32>
    %181 = arith.mulf %180, %176 : vector<2x32xf32>
    %182 = arith.mulf %181, %176 : vector<2x32xf32>
    %183 = arith.subf %179, %182 : vector<2x32xf32>
    %184 = vector.broadcast %178 : vector<1x32xf32> to vector<2x32xf32>
    %185 = arith.mulf %184, %183 : vector<2x32xf32>
    %cst_98 = arith.constant 5.000000e-01 : f32
    %186 = vector.broadcast %cst_98 : f32 to vector<1x32xf32>
    %187 = arith.mulf %186, %4 : vector<1x32xf32>
    %cst_99 = arith.constant 6.000000e+00 : f32
    %188 = vector.broadcast %cst_99 : f32 to vector<1x32xf32>
    %189 = arith.mulf %187, %188 : vector<1x32xf32>
    %190 = vector.broadcast %189 : vector<1x32xf32> to vector<2x32xf32>
    %191 = arith.mulf %190, %174 : vector<2x32xf32>
    %192 = arith.mulf %191, %174 : vector<2x32xf32>
    %193 = arith.cmpf olt, %176, %174 : vector<2x32xf32>
    %194 = arith.select %193, %185, %192 : vector<2x32xi1>, vector<2x32xf32>
    %cst_100 = arith.constant 0.951932549 : f32
    %195 = vector.broadcast %cst_100 : f32 to vector<2x32xf32>
    %196 = arith.mulf %195, %139 : vector<2x32xf32>
    %197 = arith.subf %170, %194 : vector<2x32xf32>
    %cst_101 = arith.constant 4878.84473 : f32
    %198 = vector.broadcast %cst_101 : f32 to vector<2x32xf32>
    %199 = arith.mulf %198, %197 : vector<2x32xf32>
    %200 = arith.addf %196, %199 : vector<2x32xf32>
    %201 = arith.select %168, %139, %200 : vector<2x32xi1>, vector<2x32xf32>
    %cst_102 = arith.constant 2.000000e+00 : f32
    %202 = vector.broadcast %cst_102 : f32 to vector<2x32xf32>
    %203 = arith.cmpf oge, %201, %202 : vector<2x32xf32>
    %204 = arith.extui %203 : vector<2x32xi1> to vector<2x32xi32>
    %205 = arith.sitofp %204 : vector<2x32xi32> to vector<2x32xf32>
    %cst_103 = arith.constant 0.000000e+00 : f32
    %206 = vector.broadcast %cst_103 : f32 to vector<2x32xf32>
    %207 = arith.select %168, %206, %205 : vector<2x32xi1>, vector<2x32xf32>
    %cst_104 = arith.constant 0.000000e+00 : f32
    %208 = vector.broadcast %cst_104 : f32 to vector<2x32xf32>
    %209 = arith.cmpf ogt, %207, %208 : vector<2x32xf32>
    %cst_105 = arith.constant 1.000000e+00 : f32
    %210 = vector.broadcast %cst_105 : f32 to vector<2x32xf32>
    %211 = arith.subf %133, %210 : vector<2x32xf32>
    %cst_106 = arith.constant 0.000000e+00 : f32
    %212 = vector.broadcast %cst_106 : f32 to vector<2x32xf32>
    %213 = arith.maximumf %211, %212 : vector<2x32xf32>
    %cst_107 = arith.constant 3.000000e+00 : f32
    %214 = vector.broadcast %cst_107 : f32 to vector<2x32xf32>
    %215 = arith.select %209, %214, %213 : vector<2x32xi1>, vector<2x32xf32>
    %c0_108 = arith.constant 0 : index
    %c0_109 = arith.constant 0 : index
    %216 = vector.load %arg10[%c0_108, %c0_109] : memref<2x32xf32, #tpu.memory_space<vmem>>, vector<2x32xf32>
    tpu.vector_store %arg10[%c0_108, %c0_109], %215 {strides = array<i32>} : memref<2x32xf32, #tpu.memory_space<vmem>>, vector<2x32xf32>,
    %c0_110 = arith.constant 0 : index
    %c0_111 = arith.constant 0 : index
    %217 = vector.load %arg8[%c0_110, %c0_111] : memref<2x32xf32, #tpu.memory_space<vmem>>, vector<2x32xf32>
    tpu.vector_store %arg8[%c0_110, %c0_111], %201 {strides = array<i32>} : memref<2x32xf32, #tpu.memory_space<vmem>>, vector<2x32xf32>,
    %c0_112 = arith.constant 0 : index
    %c0_113 = arith.constant 0 : index
    %218 = vector.load %arg9[%c0_112, %c0_113] : memref<2x32xf32, #tpu.memory_space<vmem>>, vector<2x32xf32>
    tpu.vector_store %arg9[%c0_112, %c0_113], %166 {strides = array<i32>} : memref<2x32xf32, #tpu.memory_space<vmem>>, vector<2x32xf32>,
    %c0_114 = arith.constant 0 : index
    %c0_115 = arith.constant 0 : index
    %219 = vector.load %arg7[%c0_114, %c0_115] : memref<2x32xf32, #tpu.memory_space<vmem>>, vector<2x32xf32>
    tpu.vector_store %arg7[%c0_114, %c0_115], %207 {strides = array<i32>} : memref<2x32xf32, #tpu.memory_space<vmem>>, vector<2x32xf32>,
    %c0_116 = arith.constant 0 : index
    %c0_117 = arith.constant 0 : index
    %220 = vector.load %arg11[%c0_116, %c0_117] : memref<2x32xf32, #tpu.memory_space<vmem>>, vector<2x32xf32>
    %cst_118 = arith.constant 0.951229453 : f32
    %221 = vector.broadcast %cst_118 : f32 to vector<2x32xf32>
    %222 = arith.mulf %221, %220 : vector<2x32xf32>
    %cst_119 = arith.constant 0.0487705767 : f32
    %223 = vector.broadcast %cst_119 : f32 to vector<2x32xf32>
    %224 = arith.mulf %223, %207 : vector<2x32xf32>
    %225 = arith.addf %222, %224 : vector<2x32xf32>
    %c0_120 = arith.constant 0 : index
    %c0_121 = arith.constant 0 : index
    %226 = vector.load %arg11[%c0_120, %c0_121] : memref<2x32xf32, #tpu.memory_space<vmem>>, vector<2x32xf32>
    tpu.vector_store %arg11[%c0_120, %c0_121], %225 {strides = array<i32>} : memref<2x32xf32, #tpu.memory_space<vmem>>, vector<2x32xf32>,
    %227 = vector.extract_strided_slice %10 {offsets = [0, 64], sizes = [2, 32], strides = [1, 1]} : vector<2x128xf32> to vector<2x32xf32>
    %c0_122 = arith.constant 0 : index
    %c0_123 = arith.constant 0 : index
    %228 = vector.load %arg7[%c0_122, %c0_123] : memref<2x32xf32, #tpu.memory_space<vmem>>, vector<2x32xf32>
    %c0_124 = arith.constant 0 : index
    %c0_125 = arith.constant 0 : index
    %229 = vector.load %arg6[%c0_124, %c0_125] : memref<2x128xf32, #tpu.memory_space<vmem>>, vector<2x128xf32>
    %230 = arith.truncf %228 : vector<2x32xf32> to vector<2x32xbf16>
    %cst_126 = arith.constant dense<0.000000e+00> : vector<2x128xf32>
    %231 = tpu.matmul %230, %3, %cst_126 {dimension_numbers = #tpu.dot_dimension_numbers<[1], [0], [0], [1], [0, 0, 1, 1], [], []>} : vector<2x32xbf16>, vector<32x128xbf16>, vector<2x128xf32> -> vector<2x128xf32>
    %232 = arith.addf %229, %231 : vector<2x128xf32>
    %233 = vector.extract_strided_slice %232 {offsets = [0, 0], sizes = [2, 32], strides = [1, 1]} : vector<2x128xf32> to vector<2x32xf32>
    %c96_i32_127 = arith.constant 96 : i32
    %234 = tpu.dynamic_rotate %232 by %c96_i32_127 dim 1 : vector<2x128xf32>, i32 -> vector<2x128xf32>
    %cst_128 = arith.constant 0.000000e+00 : f32
    %235 = vector.broadcast %cst_128 : f32 to vector<2x128xf32>
    %236 = arith.select %7, %234, %235 : vector<2x128xi1>, vector<2x128xf32>
    %c0_129 = arith.constant 0 : index
    %c0_130 = arith.constant 0 : index
    %237 = vector.load %arg6[%c0_129, %c0_130] : memref<2x128xf32, #tpu.memory_space<vmem>>, vector<2x128xf32>
    tpu.vector_store %arg6[%c0_129, %c0_130], %236 {strides = array<i32>} : memref<2x128xf32, #tpu.memory_space<vmem>>, vector<2x128xf32>,
    %238 = arith.addf %227, %233 : vector<2x32xf32>
    %c0_131 = arith.constant 0 : index
    %c0_132 = arith.constant 0 : index
    %239 = vector.load %arg8[%c0_131, %c0_132] : memref<2x32xf32, #tpu.memory_space<vmem>>, vector<2x32xf32>
    %c0_133 = arith.constant 0 : index
    %c0_134 = arith.constant 0 : index
    %240 = vector.load %arg9[%c0_133, %c0_134] : memref<2x32xf32, #tpu.memory_space<vmem>>, vector<2x32xf32>
    %c0_135 = arith.constant 0 : index
    %c0_136 = arith.constant 0 : index
    %241 = vector.load %arg10[%c0_135, %c0_136] : memref<2x32xf32, #tpu.memory_space<vmem>>, vector<2x32xf32>
    %cst_137 = arith.constant 1.000000e+00 : f32
    %242 = vector.broadcast %cst_137 : f32 to vector<2x32xf32>
    %243 = arith.subf %242, %228 : vector<2x32xf32>
    %244 = arith.mulf %243, %239 : vector<2x32xf32>
    %cst_138 = arith.constant 5.000000e-01 : f32
    %245 = vector.broadcast %cst_138 : f32 to vector<2x32xf32>
    %246 = arith.mulf %228, %245 : vector<2x32xf32>
    %247 = arith.addf %244, %246 : vector<2x32xf32>
    %cst_139 = arith.constant 5.000000e+00 : f32
    %248 = vector.broadcast %cst_139 : f32 to vector<2x32xf32>
    %249 = arith.mulf %248, %228 : vector<2x32xf32>
    %cst_140 = arith.constant 5.000000e+00 : f32
    %250 = vector.broadcast %cst_140 : f32 to vector<2x32xf32>
    %251 = arith.subf %250, %240 : vector<2x32xf32>
    %cst_141 = arith.constant 0.972999989 : f32
    %252 = vector.broadcast %cst_141 : f32 to vector<2x32xf32>
    %253 = arith.subf %249, %252 : vector<2x32xf32>
    %cst_142 = arith.constant 0.000000e+00 : f32
    %254 = vector.broadcast %cst_142 : f32 to vector<2x32xf32>
    %255 = arith.maximumf %253, %254 : vector<2x32xf32>
    %cst_143 = arith.constant 0.000000e+00 : f32
    %256 = vector.broadcast %cst_143 : f32 to vector<2x32xf32>
    %257 = arith.maximumf %251, %256 : vector<2x32xf32>
    %258 = arith.mulf %255, %257 : vector<2x32xf32>
    %cst_144 = arith.constant 5.000000e-01 : f32
    %259 = vector.broadcast %cst_144 : f32 to vector<2x32xf32>
    %260 = arith.mulf %259, %257 : vector<2x32xf32>
    %261 = arith.mulf %260, %257 : vector<2x32xf32>
    %262 = arith.subf %258, %261 : vector<2x32xf32>
    %cst_145 = arith.constant 7.200000e-05 : f32
    %263 = vector.broadcast %cst_145 : f32 to vector<2x32xf32>
    %264 = arith.mulf %263, %262 : vector<2x32xf32>
    %cst_146 = arith.constant 3.600000e-05 : f32
    %265 = vector.broadcast %cst_146 : f32 to vector<2x32xf32>
    %266 = arith.mulf %265, %255 : vector<2x32xf32>
    %267 = arith.mulf %266, %255 : vector<2x32xf32>
    %268 = arith.cmpf olt, %257, %255 : vector<2x32xf32>
    %269 = arith.select %268, %264, %267 : vector<2x32xi1>, vector<2x32xf32>
    %cst_147 = arith.constant 0.998572468 : f32
    %270 = vector.broadcast %cst_147 : f32 to vector<2x32xf32>
    %271 = arith.mulf %270, %240 : vector<2x32xf32>
    %cst_148 = arith.constant 142.755157 : f32
    %272 = vector.broadcast %cst_148 : f32 to vector<2x32xf32>
    %273 = arith.mulf %272, %269 : vector<2x32xf32>
    %274 = arith.addf %271, %273 : vector<2x32xf32>
    %cst_149 = arith.constant 0.000000e+00 : f32
    %275 = vector.broadcast %cst_149 : f32 to vector<2x32xf32>
    %276 = arith.cmpf ogt, %241, %275 : vector<2x32xf32>
    %cst_150 = arith.constant 0.000000e+00 : f32
    %277 = vector.broadcast %cst_150 : f32 to vector<2x32xf32>
    %278 = arith.maximumf %238, %277 : vector<2x32xf32>
    %cst_151 = arith.constant 7.450000e-01 : f32
    %279 = vector.broadcast %cst_151 : f32 to vector<2x32xf32>
    %280 = arith.subf %274, %279 : vector<2x32xf32>
    %cst_152 = arith.constant 0.000000e+00 : f32
    %281 = vector.broadcast %cst_152 : f32 to vector<2x32xf32>
    %282 = arith.maximumf %280, %281 : vector<2x32xf32>
    %cst_153 = arith.constant 0.000000e+00 : f32
    %283 = vector.broadcast %cst_153 : f32 to vector<2x32xf32>
    %284 = arith.maximumf %247, %283 : vector<2x32xf32>
    %cst_154 = arith.constant 6.000000e+00 : f32
    %285 = vector.broadcast %cst_154 : f32 to vector<1x32xf32>
    %286 = arith.mulf %4, %285 : vector<1x32xf32>
    %287 = arith.mulf %282, %284 : vector<2x32xf32>
    %cst_155 = arith.constant 5.000000e-01 : f32
    %288 = vector.broadcast %cst_155 : f32 to vector<2x32xf32>
    %289 = arith.mulf %288, %284 : vector<2x32xf32>
    %290 = arith.mulf %289, %284 : vector<2x32xf32>
    %291 = arith.subf %287, %290 : vector<2x32xf32>
    %292 = vector.broadcast %286 : vector<1x32xf32> to vector<2x32xf32>
    %293 = arith.mulf %292, %291 : vector<2x32xf32>
    %cst_156 = arith.constant 5.000000e-01 : f32
    %294 = vector.broadcast %cst_156 : f32 to vector<1x32xf32>
    %295 = arith.mulf %294, %4 : vector<1x32xf32>
    %cst_157 = arith.constant 6.000000e+00 : f32
    %296 = vector.broadcast %cst_157 : f32 to vector<1x32xf32>
    %297 = arith.mulf %295, %296 : vector<1x32xf32>
    %298 = vector.broadcast %297 : vector<1x32xf32> to vector<2x32xf32>
    %299 = arith.mulf %298, %282 : vector<2x32xf32>
    %300 = arith.mulf %299, %282 : vector<2x32xf32>
    %301 = arith.cmpf olt, %284, %282 : vector<2x32xf32>
    %302 = arith.select %301, %293, %300 : vector<2x32xi1>, vector<2x32xf32>
    %cst_158 = arith.constant 0.951932549 : f32
    %303 = vector.broadcast %cst_158 : f32 to vector<2x32xf32>
    %304 = arith.mulf %303, %247 : vector<2x32xf32>
    %305 = arith.subf %278, %302 : vector<2x32xf32>
    %cst_159 = arith.constant 4878.84473 : f32
    %306 = vector.broadcast %cst_159 : f32 to vector<2x32xf32>
    %307 = arith.mulf %306, %305 : vector<2x32xf32>
    %308 = arith.addf %304, %307 : vector<2x32xf32>
    %309 = arith.select %276, %247, %308 : vector<2x32xi1>, vector<2x32xf32>
    %cst_160 = arith.constant 2.000000e+00 : f32
    %310 = vector.broadcast %cst_160 : f32 to vector<2x32xf32>
    %311 = arith.cmpf oge, %309, %310 : vector<2x32xf32>
    %312 = arith.extui %311 : vector<2x32xi1> to vector<2x32xi32>
    %313 = arith.sitofp %312 : vector<2x32xi32> to vector<2x32xf32>
    %cst_161 = arith.constant 0.000000e+00 : f32
    %314 = vector.broadcast %cst_161 : f32 to vector<2x32xf32>
    %315 = arith.select %276, %314, %313 : vector<2x32xi1>, vector<2x32xf32>
    %cst_162 = arith.constant 0.000000e+00 : f32
    %316 = vector.broadcast %cst_162 : f32 to vector<2x32xf32>
    %317 = arith.cmpf ogt, %315, %316 : vector<2x32xf32>
    %cst_163 = arith.constant 1.000000e+00 : f32
    %318 = vector.broadcast %cst_163 : f32 to vector<2x32xf32>
    %319 = arith.subf %241, %318 : vector<2x32xf32>
    %cst_164 = arith.constant 0.000000e+00 : f32
    %320 = vector.broadcast %cst_164 : f32 to vector<2x32xf32>
    %321 = arith.maximumf %319, %320 : vector<2x32xf32>
    %cst_165 = arith.constant 3.000000e+00 : f32
    %322 = vector.broadcast %cst_165 : f32 to vector<2x32xf32>
    %323 = arith.select %317, %322, %321 : vector<2x32xi1>, vector<2x32xf32>
    %c0_166 = arith.constant 0 : index
    %c0_167 = arith.constant 0 : index
    %324 = vector.load %arg10[%c0_166, %c0_167] : memref<2x32xf32, #tpu.memory_space<vmem>>, vector<2x32xf32>
    tpu.vector_store %arg10[%c0_166, %c0_167], %323 {strides = array<i32>} : memref<2x32xf32, #tpu.memory_space<vmem>>, vector<2x32xf32>,
    %c0_168 = arith.constant 0 : index
    %c0_169 = arith.constant 0 : index
    %325 = vector.load %arg8[%c0_168, %c0_169] : memref<2x32xf32, #tpu.memory_space<vmem>>, vector<2x32xf32>
    tpu.vector_store %arg8[%c0_168, %c0_169], %309 {strides = array<i32>} : memref<2x32xf32, #tpu.memory_space<vmem>>, vector<2x32xf32>,
    %c0_170 = arith.constant 0 : index
    %c0_171 = arith.constant 0 : index
    %326 = vector.load %arg9[%c0_170, %c0_171] : memref<2x32xf32, #tpu.memory_space<vmem>>, vector<2x32xf32>
    tpu.vector_store %arg9[%c0_170, %c0_171], %274 {strides = array<i32>} : memref<2x32xf32, #tpu.memory_space<vmem>>, vector<2x32xf32>,
    %c0_172 = arith.constant 0 : index
    %c0_173 = arith.constant 0 : index
    %327 = vector.load %arg7[%c0_172, %c0_173] : memref<2x32xf32, #tpu.memory_space<vmem>>, vector<2x32xf32>
    tpu.vector_store %arg7[%c0_172, %c0_173], %315 {strides = array<i32>} : memref<2x32xf32, #tpu.memory_space<vmem>>, vector<2x32xf32>,
    %c0_174 = arith.constant 0 : index
    %c0_175 = arith.constant 0 : index
    %328 = vector.load %arg11[%c0_174, %c0_175] : memref<2x32xf32, #tpu.memory_space<vmem>>, vector<2x32xf32>
    %cst_176 = arith.constant 0.951229453 : f32
    %329 = vector.broadcast %cst_176 : f32 to vector<2x32xf32>
    %330 = arith.mulf %329, %328 : vector<2x32xf32>
    %cst_177 = arith.constant 0.0487705767 : f32
    %331 = vector.broadcast %cst_177 : f32 to vector<2x32xf32>
    %332 = arith.mulf %331, %315 : vector<2x32xf32>
    %333 = arith.addf %330, %332 : vector<2x32xf32>
    %c0_178 = arith.constant 0 : index
    %c0_179 = arith.constant 0 : index
    %334 = vector.load %arg11[%c0_178, %c0_179] : memref<2x32xf32, #tpu.memory_space<vmem>>, vector<2x32xf32>
    tpu.vector_store %arg11[%c0_178, %c0_179], %333 {strides = array<i32>} : memref<2x32xf32, #tpu.memory_space<vmem>>, vector<2x32xf32>,
    %335 = vector.extract_strided_slice %10 {offsets = [0, 96], sizes = [2, 32], strides = [1, 1]} : vector<2x128xf32> to vector<2x32xf32>
    %c0_180 = arith.constant 0 : index
    %c0_181 = arith.constant 0 : index
    %336 = vector.load %arg7[%c0_180, %c0_181] : memref<2x32xf32, #tpu.memory_space<vmem>>, vector<2x32xf32>
    %c0_182 = arith.constant 0 : index
    %c0_183 = arith.constant 0 : index
    %337 = vector.load %arg6[%c0_182, %c0_183] : memref<2x128xf32, #tpu.memory_space<vmem>>, vector<2x128xf32>
    %338 = arith.truncf %336 : vector<2x32xf32> to vector<2x32xbf16>
    %cst_184 = arith.constant dense<0.000000e+00> : vector<2x128xf32>
    %339 = tpu.matmul %338, %3, %cst_184 {dimension_numbers = #tpu.dot_dimension_numbers<[1], [0], [0], [1], [0, 0, 1, 1], [], []>} : vector<2x32xbf16>, vector<32x128xbf16>, vector<2x128xf32> -> vector<2x128xf32>
    %340 = arith.addf %337, %339 : vector<2x128xf32>
    %341 = vector.extract_strided_slice %340 {offsets = [0, 0], sizes = [2, 32], strides = [1, 1]} : vector<2x128xf32> to vector<2x32xf32>
    %c96_i32_185 = arith.constant 96 : i32
    %342 = tpu.dynamic_rotate %340 by %c96_i32_185 dim 1 : vector<2x128xf32>, i32 -> vector<2x128xf32>
    %cst_186 = arith.constant 0.000000e+00 : f32
    %343 = vector.broadcast %cst_186 : f32 to vector<2x128xf32>
    %344 = arith.select %7, %342, %343 : vector<2x128xi1>, vector<2x128xf32>
    %c0_187 = arith.constant 0 : index
    %c0_188 = arith.constant 0 : index
    %345 = vector.load %arg6[%c0_187, %c0_188] : memref<2x128xf32, #tpu.memory_space<vmem>>, vector<2x128xf32>
    tpu.vector_store %arg6[%c0_187, %c0_188], %344 {strides = array<i32>} : memref<2x128xf32, #tpu.memory_space<vmem>>, vector<2x128xf32>,
    %346 = arith.addf %335, %341 : vector<2x32xf32>
    %c0_189 = arith.constant 0 : index
    %c0_190 = arith.constant 0 : index
    %347 = vector.load %arg8[%c0_189, %c0_190] : memref<2x32xf32, #tpu.memory_space<vmem>>, vector<2x32xf32>
    %c0_191 = arith.constant 0 : index
    %c0_192 = arith.constant 0 : index
    %348 = vector.load %arg9[%c0_191, %c0_192] : memref<2x32xf32, #tpu.memory_space<vmem>>, vector<2x32xf32>
    %c0_193 = arith.constant 0 : index
    %c0_194 = arith.constant 0 : index
    %349 = vector.load %arg10[%c0_193, %c0_194] : memref<2x32xf32, #tpu.memory_space<vmem>>, vector<2x32xf32>
    %cst_195 = arith.constant 1.000000e+00 : f32
    %350 = vector.broadcast %cst_195 : f32 to vector<2x32xf32>
    %351 = arith.subf %350, %336 : vector<2x32xf32>
    %352 = arith.mulf %351, %347 : vector<2x32xf32>
    %cst_196 = arith.constant 5.000000e-01 : f32
    %353 = vector.broadcast %cst_196 : f32 to vector<2x32xf32>
    %354 = arith.mulf %336, %353 : vector<2x32xf32>
    %355 = arith.addf %352, %354 : vector<2x32xf32>
    %cst_197 = arith.constant 5.000000e+00 : f32
    %356 = vector.broadcast %cst_197 : f32 to vector<2x32xf32>
    %357 = arith.mulf %356, %336 : vector<2x32xf32>
    %cst_198 = arith.constant 5.000000e+00 : f32
    %358 = vector.broadcast %cst_198 : f32 to vector<2x32xf32>
    %359 = arith.subf %358, %348 : vector<2x32xf32>
    %cst_199 = arith.constant 0.972999989 : f32
    %360 = vector.broadcast %cst_199 : f32 to vector<2x32xf32>
    %361 = arith.subf %357, %360 : vector<2x32xf32>
    %cst_200 = arith.constant 0.000000e+00 : f32
    %362 = vector.broadcast %cst_200 : f32 to vector<2x32xf32>
    %363 = arith.maximumf %361, %362 : vector<2x32xf32>
    %cst_201 = arith.constant 0.000000e+00 : f32
    %364 = vector.broadcast %cst_201 : f32 to vector<2x32xf32>
    %365 = arith.maximumf %359, %364 : vector<2x32xf32>
    %366 = arith.mulf %363, %365 : vector<2x32xf32>
    %cst_202 = arith.constant 5.000000e-01 : f32
    %367 = vector.broadcast %cst_202 : f32 to vector<2x32xf32>
    %368 = arith.mulf %367, %365 : vector<2x32xf32>
    %369 = arith.mulf %368, %365 : vector<2x32xf32>
    %370 = arith.subf %366, %369 : vector<2x32xf32>
    %cst_203 = arith.constant 7.200000e-05 : f32
    %371 = vector.broadcast %cst_203 : f32 to vector<2x32xf32>
    %372 = arith.mulf %371, %370 : vector<2x32xf32>
    %cst_204 = arith.constant 3.600000e-05 : f32
    %373 = vector.broadcast %cst_204 : f32 to vector<2x32xf32>
    %374 = arith.mulf %373, %363 : vector<2x32xf32>
    %375 = arith.mulf %374, %363 : vector<2x32xf32>
    %376 = arith.cmpf olt, %365, %363 : vector<2x32xf32>
    %377 = arith.select %376, %372, %375 : vector<2x32xi1>, vector<2x32xf32>
    %cst_205 = arith.constant 0.998572468 : f32
    %378 = vector.broadcast %cst_205 : f32 to vector<2x32xf32>
    %379 = arith.mulf %378, %348 : vector<2x32xf32>
    %cst_206 = arith.constant 142.755157 : f32
    %380 = vector.broadcast %cst_206 : f32 to vector<2x32xf32>
    %381 = arith.mulf %380, %377 : vector<2x32xf32>
    %382 = arith.addf %379, %381 : vector<2x32xf32>
    %cst_207 = arith.constant 0.000000e+00 : f32
    %383 = vector.broadcast %cst_207 : f32 to vector<2x32xf32>
    %384 = arith.cmpf ogt, %349, %383 : vector<2x32xf32>
    %cst_208 = arith.constant 0.000000e+00 : f32
    %385 = vector.broadcast %cst_208 : f32 to vector<2x32xf32>
    %386 = arith.maximumf %346, %385 : vector<2x32xf32>
    %cst_209 = arith.constant 7.450000e-01 : f32
    %387 = vector.broadcast %cst_209 : f32 to vector<2x32xf32>
    %388 = arith.subf %382, %387 : vector<2x32xf32>
    %cst_210 = arith.constant 0.000000e+00 : f32
    %389 = vector.broadcast %cst_210 : f32 to vector<2x32xf32>
    %390 = arith.maximumf %388, %389 : vector<2x32xf32>
    %cst_211 = arith.constant 0.000000e+00 : f32
    %391 = vector.broadcast %cst_211 : f32 to vector<2x32xf32>
    %392 = arith.maximumf %355, %391 : vector<2x32xf32>
    %cst_212 = arith.constant 6.000000e+00 : f32
    %393 = vector.broadcast %cst_212 : f32 to vector<1x32xf32>
    %394 = arith.mulf %4, %393 : vector<1x32xf32>
    %395 = arith.mulf %390, %392 : vector<2x32xf32>
    %cst_213 = arith.constant 5.000000e-01 : f32
    %396 = vector.broadcast %cst_213 : f32 to vector<2x32xf32>
    %397 = arith.mulf %396, %392 : vector<2x32xf32>
    %398 = arith.mulf %397, %392 : vector<2x32xf32>
    %399 = arith.subf %395, %398 : vector<2x32xf32>
    %400 = vector.broadcast %394 : vector<1x32xf32> to vector<2x32xf32>
    %401 = arith.mulf %400, %399 : vector<2x32xf32>
    %cst_214 = arith.constant 5.000000e-01 : f32
    %402 = vector.broadcast %cst_214 : f32 to vector<1x32xf32>
    %403 = arith.mulf %402, %4 : vector<1x32xf32>
    %cst_215 = arith.constant 6.000000e+00 : f32
    %404 = vector.broadcast %cst_215 : f32 to vector<1x32xf32>
    %405 = arith.mulf %403, %404 : vector<1x32xf32>
    %406 = vector.broadcast %405 : vector<1x32xf32> to vector<2x32xf32>
    %407 = arith.mulf %406, %390 : vector<2x32xf32>
    %408 = arith.mulf %407, %390 : vector<2x32xf32>
    %409 = arith.cmpf olt, %392, %390 : vector<2x32xf32>
    %410 = arith.select %409, %401, %408 : vector<2x32xi1>, vector<2x32xf32>
    %cst_216 = arith.constant 0.951932549 : f32
    %411 = vector.broadcast %cst_216 : f32 to vector<2x32xf32>
    %412 = arith.mulf %411, %355 : vector<2x32xf32>
    %413 = arith.subf %386, %410 : vector<2x32xf32>
    %cst_217 = arith.constant 4878.84473 : f32
    %414 = vector.broadcast %cst_217 : f32 to vector<2x32xf32>
    %415 = arith.mulf %414, %413 : vector<2x32xf32>
    %416 = arith.addf %412, %415 : vector<2x32xf32>
    %417 = arith.select %384, %355, %416 : vector<2x32xi1>, vector<2x32xf32>
    %cst_218 = arith.constant 2.000000e+00 : f32
    %418 = vector.broadcast %cst_218 : f32 to vector<2x32xf32>
    %419 = arith.cmpf oge, %417, %418 : vector<2x32xf32>
    %420 = arith.extui %419 : vector<2x32xi1> to vector<2x32xi32>
    %421 = arith.sitofp %420 : vector<2x32xi32> to vector<2x32xf32>
    %cst_219 = arith.constant 0.000000e+00 : f32
    %422 = vector.broadcast %cst_219 : f32 to vector<2x32xf32>
    %423 = arith.select %384, %422, %421 : vector<2x32xi1>, vector<2x32xf32>
    %cst_220 = arith.constant 0.000000e+00 : f32
    %424 = vector.broadcast %cst_220 : f32 to vector<2x32xf32>
    %425 = arith.cmpf ogt, %423, %424 : vector<2x32xf32>
    %cst_221 = arith.constant 1.000000e+00 : f32
    %426 = vector.broadcast %cst_221 : f32 to vector<2x32xf32>
    %427 = arith.subf %349, %426 : vector<2x32xf32>
    %cst_222 = arith.constant 0.000000e+00 : f32
    %428 = vector.broadcast %cst_222 : f32 to vector<2x32xf32>
    %429 = arith.maximumf %427, %428 : vector<2x32xf32>
    %cst_223 = arith.constant 3.000000e+00 : f32
    %430 = vector.broadcast %cst_223 : f32 to vector<2x32xf32>
    %431 = arith.select %425, %430, %429 : vector<2x32xi1>, vector<2x32xf32>
    %c0_224 = arith.constant 0 : index
    %c0_225 = arith.constant 0 : index
    %432 = vector.load %arg10[%c0_224, %c0_225] : memref<2x32xf32, #tpu.memory_space<vmem>>, vector<2x32xf32>
    tpu.vector_store %arg10[%c0_224, %c0_225], %431 {strides = array<i32>} : memref<2x32xf32, #tpu.memory_space<vmem>>, vector<2x32xf32>,
    %c0_226 = arith.constant 0 : index
    %c0_227 = arith.constant 0 : index
    %433 = vector.load %arg8[%c0_226, %c0_227] : memref<2x32xf32, #tpu.memory_space<vmem>>, vector<2x32xf32>
    tpu.vector_store %arg8[%c0_226, %c0_227], %417 {strides = array<i32>} : memref<2x32xf32, #tpu.memory_space<vmem>>, vector<2x32xf32>,
    %c0_228 = arith.constant 0 : index
    %c0_229 = arith.constant 0 : index
    %434 = vector.load %arg9[%c0_228, %c0_229] : memref<2x32xf32, #tpu.memory_space<vmem>>, vector<2x32xf32>
    tpu.vector_store %arg9[%c0_228, %c0_229], %382 {strides = array<i32>} : memref<2x32xf32, #tpu.memory_space<vmem>>, vector<2x32xf32>,
    %c0_230 = arith.constant 0 : index
    %c0_231 = arith.constant 0 : index
    %435 = vector.load %arg7[%c0_230, %c0_231] : memref<2x32xf32, #tpu.memory_space<vmem>>, vector<2x32xf32>
    tpu.vector_store %arg7[%c0_230, %c0_231], %423 {strides = array<i32>} : memref<2x32xf32, #tpu.memory_space<vmem>>, vector<2x32xf32>,
    %c0_232 = arith.constant 0 : index
    %c0_233 = arith.constant 0 : index
    %436 = vector.load %arg11[%c0_232, %c0_233] : memref<2x32xf32, #tpu.memory_space<vmem>>, vector<2x32xf32>
    %cst_234 = arith.constant 0.951229453 : f32
    %437 = vector.broadcast %cst_234 : f32 to vector<2x32xf32>
    %438 = arith.mulf %437, %436 : vector<2x32xf32>
    %cst_235 = arith.constant 0.0487705767 : f32
    %439 = vector.broadcast %cst_235 : f32 to vector<2x32xf32>
    %440 = arith.mulf %439, %423 : vector<2x32xf32>
    %441 = arith.addf %438, %440 : vector<2x32xf32>
    %c0_236 = arith.constant 0 : index
    %c0_237 = arith.constant 0 : index
    %442 = vector.load %arg11[%c0_236, %c0_237] : memref<2x32xf32, #tpu.memory_space<vmem>>, vector<2x32xf32>
    tpu.vector_store %arg11[%c0_236, %c0_237], %441 {strides = array<i32>} : memref<2x32xf32, #tpu.memory_space<vmem>>, vector<2x32xf32>,
    %443 = tpu.concatenate %117, %225, %333, %441 in 1 : vector<2x32xf32>, vector<2x32xf32>, vector<2x32xf32>, vector<2x32xf32> -> vector<2x128xf32>
    %444 = arith.index_cast %c0_i32_4 : i32 to index
    %c0_238 = arith.constant 0 : index
    %c0_239 = arith.constant 0 : index
    %445 = vector.load %arg5[%444, %c0_238, %c0_239] : memref<2x2x128xf32, #tpu.memory_space<vmem>>, vector<1x2x128xf32>
    %446 = vector.shape_cast %445 : vector<1x2x128xf32> to vector<2x128xf32>
    %447 = vector.shape_cast %443 : vector<2x128xf32> to vector<1x2x128xf32>
    tpu.vector_store %arg5[%444, %c0_238, %c0_239], %447 {strides = array<i32>} : memref<2x2x128xf32, #tpu.memory_space<vmem>>, vector<1x2x128xf32>,
    %c1_i32 = arith.constant 1 : i32
    %448 = arith.index_cast %c1_i32 : i32 to index
    %c0_240 = arith.constant 0 : index
    %c0_241 = arith.constant 0 : index
    %449 = vector.load %arg2[%448, %c0_240, %c0_241] : memref<2x2x128xf32, #tpu.memory_space<vmem>>, vector<1x2x128xf32>
    %450 = vector.shape_cast %449 : vector<1x2x128xf32> to vector<2x128xf32>
    %451 = vector.extract_strided_slice %450 {offsets = [0, 0], sizes = [2, 32], strides = [1, 1]} : vector<2x128xf32> to vector<2x32xf32>
    %c0_242 = arith.constant 0 : index
    %c0_243 = arith.constant 0 : index
    %452 = vector.load %arg7[%c0_242, %c0_243] : memref<2x32xf32, #tpu.memory_space<vmem>>, vector<2x32xf32>
    %c0_244 = arith.constant 0 : index
    %c0_245 = arith.constant 0 : index
    %453 = vector.load %arg6[%c0_244, %c0_245] : memref<2x128xf32, #tpu.memory_space<vmem>>, vector<2x128xf32>
    %454 = arith.truncf %452 : vector<2x32xf32> to vector<2x32xbf16>
    %cst_246 = arith.constant dense<0.000000e+00> : vector<2x128xf32>
    %455 = tpu.matmul %454, %3, %cst_246 {dimension_numbers = #tpu.dot_dimension_numbers<[1], [0], [0], [1], [0, 0, 1, 1], [], []>} : vector<2x32xbf16>, vector<32x128xbf16>, vector<2x128xf32> -> vector<2x128xf32>
    %456 = arith.addf %453, %455 : vector<2x128xf32>
    %457 = vector.extract_strided_slice %456 {offsets = [0, 0], sizes = [2, 32], strides = [1, 1]} : vector<2x128xf32> to vector<2x32xf32>
    %c96_i32_247 = arith.constant 96 : i32
    %458 = tpu.dynamic_rotate %456 by %c96_i32_247 dim 1 : vector<2x128xf32>, i32 -> vector<2x128xf32>
    %cst_248 = arith.constant 0.000000e+00 : f32
    %459 = vector.broadcast %cst_248 : f32 to vector<2x128xf32>
    %460 = arith.select %7, %458, %459 : vector<2x128xi1>, vector<2x128xf32>
    %c0_249 = arith.constant 0 : index
    %c0_250 = arith.constant 0 : index
    %461 = vector.load %arg6[%c0_249, %c0_250] : memref<2x128xf32, #tpu.memory_space<vmem>>, vector<2x128xf32>
    tpu.vector_store %arg6[%c0_249, %c0_250], %460 {strides = array<i32>} : memref<2x128xf32, #tpu.memory_space<vmem>>, vector<2x128xf32>,
    %462 = arith.addf %451, %457 : vector<2x32xf32>
    %c0_251 = arith.constant 0 : index
    %c0_252 = arith.constant 0 : index
    %463 = vector.load %arg8[%c0_251, %c0_252] : memref<2x32xf32, #tpu.memory_space<vmem>>, vector<2x32xf32>
    %c0_253 = arith.constant 0 : index
    %c0_254 = arith.constant 0 : index
    %464 = vector.load %arg9[%c0_253, %c0_254] : memref<2x32xf32, #tpu.memory_space<vmem>>, vector<2x32xf32>
    %c0_255 = arith.constant 0 : index
    %c0_256 = arith.constant 0 : index
    %465 = vector.load %arg10[%c0_255, %c0_256] : memref<2x32xf32, #tpu.memory_space<vmem>>, vector<2x32xf32>
    %cst_257 = arith.constant 1.000000e+00 : f32
    %466 = vector.broadcast %cst_257 : f32 to vector<2x32xf32>
    %467 = arith.subf %466, %452 : vector<2x32xf32>
    %468 = arith.mulf %467, %463 : vector<2x32xf32>
    %cst_258 = arith.constant 5.000000e-01 : f32
    %469 = vector.broadcast %cst_258 : f32 to vector<2x32xf32>
    %470 = arith.mulf %452, %469 : vector<2x32xf32>
    %471 = arith.addf %468, %470 : vector<2x32xf32>
    %cst_259 = arith.constant 5.000000e+00 : f32
    %472 = vector.broadcast %cst_259 : f32 to vector<2x32xf32>
    %473 = arith.mulf %472, %452 : vector<2x32xf32>
    %cst_260 = arith.constant 5.000000e+00 : f32
    %474 = vector.broadcast %cst_260 : f32 to vector<2x32xf32>
    %475 = arith.subf %474, %464 : vector<2x32xf32>
    %cst_261 = arith.constant 0.972999989 : f32
    %476 = vector.broadcast %cst_261 : f32 to vector<2x32xf32>
    %477 = arith.subf %473, %476 : vector<2x32xf32>
    %cst_262 = arith.constant 0.000000e+00 : f32
    %478 = vector.broadcast %cst_262 : f32 to vector<2x32xf32>
    %479 = arith.maximumf %477, %478 : vector<2x32xf32>
    %cst_263 = arith.constant 0.000000e+00 : f32
    %480 = vector.broadcast %cst_263 : f32 to vector<2x32xf32>
    %481 = arith.maximumf %475, %480 : vector<2x32xf32>
    %482 = arith.mulf %479, %481 : vector<2x32xf32>
    %cst_264 = arith.constant 5.000000e-01 : f32
    %483 = vector.broadcast %cst_264 : f32 to vector<2x32xf32>
    %484 = arith.mulf %483, %481 : vector<2x32xf32>
    %485 = arith.mulf %484, %481 : vector<2x32xf32>
    %486 = arith.subf %482, %485 : vector<2x32xf32>
    %cst_265 = arith.constant 7.200000e-05 : f32
    %487 = vector.broadcast %cst_265 : f32 to vector<2x32xf32>
    %488 = arith.mulf %487, %486 : vector<2x32xf32>
    %cst_266 = arith.constant 3.600000e-05 : f32
    %489 = vector.broadcast %cst_266 : f32 to vector<2x32xf32>
    %490 = arith.mulf %489, %479 : vector<2x32xf32>
    %491 = arith.mulf %490, %479 : vector<2x32xf32>
    %492 = arith.cmpf olt, %481, %479 : vector<2x32xf32>
    %493 = arith.select %492, %488, %491 : vector<2x32xi1>, vector<2x32xf32>
    %cst_267 = arith.constant 0.998572468 : f32
    %494 = vector.broadcast %cst_267 : f32 to vector<2x32xf32>
    %495 = arith.mulf %494, %464 : vector<2x32xf32>
    %cst_268 = arith.constant 142.755157 : f32
    %496 = vector.broadcast %cst_268 : f32 to vector<2x32xf32>
    %497 = arith.mulf %496, %493 : vector<2x32xf32>
    %498 = arith.addf %495, %497 : vector<2x32xf32>
    %cst_269 = arith.constant 0.000000e+00 : f32
    %499 = vector.broadcast %cst_269 : f32 to vector<2x32xf32>
    %500 = arith.cmpf ogt, %465, %499 : vector<2x32xf32>
    %cst_270 = arith.constant 0.000000e+00 : f32
    %501 = vector.broadcast %cst_270 : f32 to vector<2x32xf32>
    %502 = arith.maximumf %462, %501 : vector<2x32xf32>
    %cst_271 = arith.constant 7.450000e-01 : f32
    %503 = vector.broadcast %cst_271 : f32 to vector<2x32xf32>
    %504 = arith.subf %498, %503 : vector<2x32xf32>
    %cst_272 = arith.constant 0.000000e+00 : f32
    %505 = vector.broadcast %cst_272 : f32 to vector<2x32xf32>
    %506 = arith.maximumf %504, %505 : vector<2x32xf32>
    %cst_273 = arith.constant 0.000000e+00 : f32
    %507 = vector.broadcast %cst_273 : f32 to vector<2x32xf32>
    %508 = arith.maximumf %471, %507 : vector<2x32xf32>
    %cst_274 = arith.constant 6.000000e+00 : f32
    %509 = vector.broadcast %cst_274 : f32 to vector<1x32xf32>
    %510 = arith.mulf %4, %509 : vector<1x32xf32>
    %511 = arith.mulf %506, %508 : vector<2x32xf32>
    %cst_275 = arith.constant 5.000000e-01 : f32
    %512 = vector.broadcast %cst_275 : f32 to vector<2x32xf32>
    %513 = arith.mulf %512, %508 : vector<2x32xf32>
    %514 = arith.mulf %513, %508 : vector<2x32xf32>
    %515 = arith.subf %511, %514 : vector<2x32xf32>
    %516 = vector.broadcast %510 : vector<1x32xf32> to vector<2x32xf32>
    %517 = arith.mulf %516, %515 : vector<2x32xf32>
    %cst_276 = arith.constant 5.000000e-01 : f32
    %518 = vector.broadcast %cst_276 : f32 to vector<1x32xf32>
    %519 = arith.mulf %518, %4 : vector<1x32xf32>
    %cst_277 = arith.constant 6.000000e+00 : f32
    %520 = vector.broadcast %cst_277 : f32 to vector<1x32xf32>
    %521 = arith.mulf %519, %520 : vector<1x32xf32>
    %522 = vector.broadcast %521 : vector<1x32xf32> to vector<2x32xf32>
    %523 = arith.mulf %522, %506 : vector<2x32xf32>
    %524 = arith.mulf %523, %506 : vector<2x32xf32>
    %525 = arith.cmpf olt, %508, %506 : vector<2x32xf32>
    %526 = arith.select %525, %517, %524 : vector<2x32xi1>, vector<2x32xf32>
    %cst_278 = arith.constant 0.951932549 : f32
    %527 = vector.broadcast %cst_278 : f32 to vector<2x32xf32>
    %528 = arith.mulf %527, %471 : vector<2x32xf32>
    %529 = arith.subf %502, %526 : vector<2x32xf32>
    %cst_279 = arith.constant 4878.84473 : f32
    %530 = vector.broadcast %cst_279 : f32 to vector<2x32xf32>
    %531 = arith.mulf %530, %529 : vector<2x32xf32>
    %532 = arith.addf %528, %531 : vector<2x32xf32>
    %533 = arith.select %500, %471, %532 : vector<2x32xi1>, vector<2x32xf32>
    %cst_280 = arith.constant 2.000000e+00 : f32
    %534 = vector.broadcast %cst_280 : f32 to vector<2x32xf32>
    %535 = arith.cmpf oge, %533, %534 : vector<2x32xf32>
    %536 = arith.extui %535 : vector<2x32xi1> to vector<2x32xi32>
    %537 = arith.sitofp %536 : vector<2x32xi32> to vector<2x32xf32>
    %cst_281 = arith.constant 0.000000e+00 : f32
    %538 = vector.broadcast %cst_281 : f32 to vector<2x32xf32>
    %539 = arith.select %500, %538, %537 : vector<2x32xi1>, vector<2x32xf32>
    %cst_282 = arith.constant 0.000000e+00 : f32
    %540 = vector.broadcast %cst_282 : f32 to vector<2x32xf32>
    %541 = arith.cmpf ogt, %539, %540 : vector<2x32xf32>
    %cst_283 = arith.constant 1.000000e+00 : f32
    %542 = vector.broadcast %cst_283 : f32 to vector<2x32xf32>
    %543 = arith.subf %465, %542 : vector<2x32xf32>
    %cst_284 = arith.constant 0.000000e+00 : f32
    %544 = vector.broadcast %cst_284 : f32 to vector<2x32xf32>
    %545 = arith.maximumf %543, %544 : vector<2x32xf32>
    %cst_285 = arith.constant 3.000000e+00 : f32
    %546 = vector.broadcast %cst_285 : f32 to vector<2x32xf32>
    %547 = arith.select %541, %546, %545 : vector<2x32xi1>, vector<2x32xf32>
    %c0_286 = arith.constant 0 : index
    %c0_287 = arith.constant 0 : index
    %548 = vector.load %arg10[%c0_286, %c0_287] : memref<2x32xf32, #tpu.memory_space<vmem>>, vector<2x32xf32>
    tpu.vector_store %arg10[%c0_286, %c0_287], %547 {strides = array<i32>} : memref<2x32xf32, #tpu.memory_space<vmem>>, vector<2x32xf32>,
    %c0_288 = arith.constant 0 : index
    %c0_289 = arith.constant 0 : index
    %549 = vector.load %arg8[%c0_288, %c0_289] : memref<2x32xf32, #tpu.memory_space<vmem>>, vector<2x32xf32>
    tpu.vector_store %arg8[%c0_288, %c0_289], %533 {strides = array<i32>} : memref<2x32xf32, #tpu.memory_space<vmem>>, vector<2x32xf32>,
    %c0_290 = arith.constant 0 : index
    %c0_291 = arith.constant 0 : index
    %550 = vector.load %arg9[%c0_290, %c0_291] : memref<2x32xf32, #tpu.memory_space<vmem>>, vector<2x32xf32>
    tpu.vector_store %arg9[%c0_290, %c0_291], %498 {strides = array<i32>} : memref<2x32xf32, #tpu.memory_space<vmem>>, vector<2x32xf32>,
    %c0_292 = arith.constant 0 : index
    %c0_293 = arith.constant 0 : index
    %551 = vector.load %arg7[%c0_292, %c0_293] : memref<2x32xf32, #tpu.memory_space<vmem>>, vector<2x32xf32>
    tpu.vector_store %arg7[%c0_292, %c0_293], %539 {strides = array<i32>} : memref<2x32xf32, #tpu.memory_space<vmem>>, vector<2x32xf32>,
    %c0_294 = arith.constant 0 : index
    %c0_295 = arith.constant 0 : index
    %552 = vector.load %arg11[%c0_294, %c0_295] : memref<2x32xf32, #tpu.memory_space<vmem>>, vector<2x32xf32>
    %cst_296 = arith.constant 0.951229453 : f32
    %553 = vector.broadcast %cst_296 : f32 to vector<2x32xf32>
    %554 = arith.mulf %553, %552 : vector<2x32xf32>
    %cst_297 = arith.constant 0.0487705767 : f32
    %555 = vector.broadcast %cst_297 : f32 to vector<2x32xf32>
    %556 = arith.mulf %555, %539 : vector<2x32xf32>
    %557 = arith.addf %554, %556 : vector<2x32xf32>
    %c0_298 = arith.constant 0 : index
    %c0_299 = arith.constant 0 : index
    %558 = vector.load %arg11[%c0_298, %c0_299] : memref<2x32xf32, #tpu.memory_space<vmem>>, vector<2x32xf32>
    tpu.vector_store %arg11[%c0_298, %c0_299], %557 {strides = array<i32>} : memref<2x32xf32, #tpu.memory_space<vmem>>, vector<2x32xf32>,
    %559 = vector.extract_strided_slice %450 {offsets = [0, 32], sizes = [2, 32], strides = [1, 1]} : vector<2x128xf32> to vector<2x32xf32>
    %c0_300 = arith.constant 0 : index
    %c0_301 = arith.constant 0 : index
    %560 = vector.load %arg7[%c0_300, %c0_301] : memref<2x32xf32, #tpu.memory_space<vmem>>, vector<2x32xf32>
    %c0_302 = arith.constant 0 : index
    %c0_303 = arith.constant 0 : index
    %561 = vector.load %arg6[%c0_302, %c0_303] : memref<2x128xf32, #tpu.memory_space<vmem>>, vector<2x128xf32>
    %562 = arith.truncf %560 : vector<2x32xf32> to vector<2x32xbf16>
    %cst_304 = arith.constant dense<0.000000e+00> : vector<2x128xf32>
    %563 = tpu.matmul %562, %3, %cst_304 {dimension_numbers = #tpu.dot_dimension_numbers<[1], [0], [0], [1], [0, 0, 1, 1], [], []>} : vector<2x32xbf16>, vector<32x128xbf16>, vector<2x128xf32> -> vector<2x128xf32>
    %564 = arith.addf %561, %563 : vector<2x128xf32>
    %565 = vector.extract_strided_slice %564 {offsets = [0, 0], sizes = [2, 32], strides = [1, 1]} : vector<2x128xf32> to vector<2x32xf32>
    %c96_i32_305 = arith.constant 96 : i32
    %566 = tpu.dynamic_rotate %564 by %c96_i32_305 dim 1 : vector<2x128xf32>, i32 -> vector<2x128xf32>
    %cst_306 = arith.constant 0.000000e+00 : f32
    %567 = vector.broadcast %cst_306 : f32 to vector<2x128xf32>
    %568 = arith.select %7, %566, %567 : vector<2x128xi1>, vector<2x128xf32>
    %c0_307 = arith.constant 0 : index
    %c0_308 = arith.constant 0 : index
    %569 = vector.load %arg6[%c0_307, %c0_308] : memref<2x128xf32, #tpu.memory_space<vmem>>, vector<2x128xf32>
    tpu.vector_store %arg6[%c0_307, %c0_308], %568 {strides = array<i32>} : memref<2x128xf32, #tpu.memory_space<vmem>>, vector<2x128xf32>,
    %570 = arith.addf %559, %565 : vector<2x32xf32>
    %c0_309 = arith.constant 0 : index
    %c0_310 = arith.constant 0 : index
    %571 = vector.load %arg8[%c0_309, %c0_310] : memref<2x32xf32, #tpu.memory_space<vmem>>, vector<2x32xf32>
    %c0_311 = arith.constant 0 : index
    %c0_312 = arith.constant 0 : index
    %572 = vector.load %arg9[%c0_311, %c0_312] : memref<2x32xf32, #tpu.memory_space<vmem>>, vector<2x32xf32>
    %c0_313 = arith.constant 0 : index
    %c0_314 = arith.constant 0 : index
    %573 = vector.load %arg10[%c0_313, %c0_314] : memref<2x32xf32, #tpu.memory_space<vmem>>, vector<2x32xf32>
    %cst_315 = arith.constant 1.000000e+00 : f32
    %574 = vector.broadcast %cst_315 : f32 to vector<2x32xf32>
    %575 = arith.subf %574, %560 : vector<2x32xf32>
    %576 = arith.mulf %575, %571 : vector<2x32xf32>
    %cst_316 = arith.constant 5.000000e-01 : f32
    %577 = vector.broadcast %cst_316 : f32 to vector<2x32xf32>
    %578 = arith.mulf %560, %577 : vector<2x32xf32>
    %579 = arith.addf %576, %578 : vector<2x32xf32>
    %cst_317 = arith.constant 5.000000e+00 : f32
    %580 = vector.broadcast %cst_317 : f32 to vector<2x32xf32>
    %581 = arith.mulf %580, %560 : vector<2x32xf32>
    %cst_318 = arith.constant 5.000000e+00 : f32
    %582 = vector.broadcast %cst_318 : f32 to vector<2x32xf32>
    %583 = arith.subf %582, %572 : vector<2x32xf32>
    %cst_319 = arith.constant 0.972999989 : f32
    %584 = vector.broadcast %cst_319 : f32 to vector<2x32xf32>
    %585 = arith.subf %581, %584 : vector<2x32xf32>
    %cst_320 = arith.constant 0.000000e+00 : f32
    %586 = vector.broadcast %cst_320 : f32 to vector<2x32xf32>
    %587 = arith.maximumf %585, %586 : vector<2x32xf32>
    %cst_321 = arith.constant 0.000000e+00 : f32
    %588 = vector.broadcast %cst_321 : f32 to vector<2x32xf32>
    %589 = arith.maximumf %583, %588 : vector<2x32xf32>
    %590 = arith.mulf %587, %589 : vector<2x32xf32>
    %cst_322 = arith.constant 5.000000e-01 : f32
    %591 = vector.broadcast %cst_322 : f32 to vector<2x32xf32>
    %592 = arith.mulf %591, %589 : vector<2x32xf32>
    %593 = arith.mulf %592, %589 : vector<2x32xf32>
    %594 = arith.subf %590, %593 : vector<2x32xf32>
    %cst_323 = arith.constant 7.200000e-05 : f32
    %595 = vector.broadcast %cst_323 : f32 to vector<2x32xf32>
    %596 = arith.mulf %595, %594 : vector<2x32xf32>
    %cst_324 = arith.constant 3.600000e-05 : f32
    %597 = vector.broadcast %cst_324 : f32 to vector<2x32xf32>
    %598 = arith.mulf %597, %587 : vector<2x32xf32>
    %599 = arith.mulf %598, %587 : vector<2x32xf32>
    %600 = arith.cmpf olt, %589, %587 : vector<2x32xf32>
    %601 = arith.select %600, %596, %599 : vector<2x32xi1>, vector<2x32xf32>
    %cst_325 = arith.constant 0.998572468 : f32
    %602 = vector.broadcast %cst_325 : f32 to vector<2x32xf32>
    %603 = arith.mulf %602, %572 : vector<2x32xf32>
    %cst_326 = arith.constant 142.755157 : f32
    %604 = vector.broadcast %cst_326 : f32 to vector<2x32xf32>
    %605 = arith.mulf %604, %601 : vector<2x32xf32>
    %606 = arith.addf %603, %605 : vector<2x32xf32>
    %cst_327 = arith.constant 0.000000e+00 : f32
    %607 = vector.broadcast %cst_327 : f32 to vector<2x32xf32>
    %608 = arith.cmpf ogt, %573, %607 : vector<2x32xf32>
    %cst_328 = arith.constant 0.000000e+00 : f32
    %609 = vector.broadcast %cst_328 : f32 to vector<2x32xf32>
    %610 = arith.maximumf %570, %609 : vector<2x32xf32>
    %cst_329 = arith.constant 7.450000e-01 : f32
    %611 = vector.broadcast %cst_329 : f32 to vector<2x32xf32>
    %612 = arith.subf %606, %611 : vector<2x32xf32>
    %cst_330 = arith.constant 0.000000e+00 : f32
    %613 = vector.broadcast %cst_330 : f32 to vector<2x32xf32>
    %614 = arith.maximumf %612, %613 : vector<2x32xf32>
    %cst_331 = arith.constant 0.000000e+00 : f32
    %615 = vector.broadcast %cst_331 : f32 to vector<2x32xf32>
    %616 = arith.maximumf %579, %615 : vector<2x32xf32>
    %cst_332 = arith.constant 6.000000e+00 : f32
    %617 = vector.broadcast %cst_332 : f32 to vector<1x32xf32>
    %618 = arith.mulf %4, %617 : vector<1x32xf32>
    %619 = arith.mulf %614, %616 : vector<2x32xf32>
    %cst_333 = arith.constant 5.000000e-01 : f32
    %620 = vector.broadcast %cst_333 : f32 to vector<2x32xf32>
    %621 = arith.mulf %620, %616 : vector<2x32xf32>
    %622 = arith.mulf %621, %616 : vector<2x32xf32>
    %623 = arith.subf %619, %622 : vector<2x32xf32>
    %624 = vector.broadcast %618 : vector<1x32xf32> to vector<2x32xf32>
    %625 = arith.mulf %624, %623 : vector<2x32xf32>
    %cst_334 = arith.constant 5.000000e-01 : f32
    %626 = vector.broadcast %cst_334 : f32 to vector<1x32xf32>
    %627 = arith.mulf %626, %4 : vector<1x32xf32>
    %cst_335 = arith.constant 6.000000e+00 : f32
    %628 = vector.broadcast %cst_335 : f32 to vector<1x32xf32>
    %629 = arith.mulf %627, %628 : vector<1x32xf32>
    %630 = vector.broadcast %629 : vector<1x32xf32> to vector<2x32xf32>
    %631 = arith.mulf %630, %614 : vector<2x32xf32>
    %632 = arith.mulf %631, %614 : vector<2x32xf32>
    %633 = arith.cmpf olt, %616, %614 : vector<2x32xf32>
    %634 = arith.select %633, %625, %632 : vector<2x32xi1>, vector<2x32xf32>
    %cst_336 = arith.constant 0.951932549 : f32
    %635 = vector.broadcast %cst_336 : f32 to vector<2x32xf32>
    %636 = arith.mulf %635, %579 : vector<2x32xf32>
    %637 = arith.subf %610, %634 : vector<2x32xf32>
    %cst_337 = arith.constant 4878.84473 : f32
    %638 = vector.broadcast %cst_337 : f32 to vector<2x32xf32>
    %639 = arith.mulf %638, %637 : vector<2x32xf32>
    %640 = arith.addf %636, %639 : vector<2x32xf32>
    %641 = arith.select %608, %579, %640 : vector<2x32xi1>, vector<2x32xf32>
    %cst_338 = arith.constant 2.000000e+00 : f32
    %642 = vector.broadcast %cst_338 : f32 to vector<2x32xf32>
    %643 = arith.cmpf oge, %641, %642 : vector<2x32xf32>
    %644 = arith.extui %643 : vector<2x32xi1> to vector<2x32xi32>
    %645 = arith.sitofp %644 : vector<2x32xi32> to vector<2x32xf32>
    %cst_339 = arith.constant 0.000000e+00 : f32
    %646 = vector.broadcast %cst_339 : f32 to vector<2x32xf32>
    %647 = arith.select %608, %646, %645 : vector<2x32xi1>, vector<2x32xf32>
    %cst_340 = arith.constant 0.000000e+00 : f32
    %648 = vector.broadcast %cst_340 : f32 to vector<2x32xf32>
    %649 = arith.cmpf ogt, %647, %648 : vector<2x32xf32>
    %cst_341 = arith.constant 1.000000e+00 : f32
    %650 = vector.broadcast %cst_341 : f32 to vector<2x32xf32>
    %651 = arith.subf %573, %650 : vector<2x32xf32>
    %cst_342 = arith.constant 0.000000e+00 : f32
    %652 = vector.broadcast %cst_342 : f32 to vector<2x32xf32>
    %653 = arith.maximumf %651, %652 : vector<2x32xf32>
    %cst_343 = arith.constant 3.000000e+00 : f32
    %654 = vector.broadcast %cst_343 : f32 to vector<2x32xf32>
    %655 = arith.select %649, %654, %653 : vector<2x32xi1>, vector<2x32xf32>
    %c0_344 = arith.constant 0 : index
    %c0_345 = arith.constant 0 : index
    %656 = vector.load %arg10[%c0_344, %c0_345] : memref<2x32xf32, #tpu.memory_space<vmem>>, vector<2x32xf32>
    tpu.vector_store %arg10[%c0_344, %c0_345], %655 {strides = array<i32>} : memref<2x32xf32, #tpu.memory_space<vmem>>, vector<2x32xf32>,
    %c0_346 = arith.constant 0 : index
    %c0_347 = arith.constant 0 : index
    %657 = vector.load %arg8[%c0_346, %c0_347] : memref<2x32xf32, #tpu.memory_space<vmem>>, vector<2x32xf32>
    tpu.vector_store %arg8[%c0_346, %c0_347], %641 {strides = array<i32>} : memref<2x32xf32, #tpu.memory_space<vmem>>, vector<2x32xf32>,
    %c0_348 = arith.constant 0 : index
    %c0_349 = arith.constant 0 : index
    %658 = vector.load %arg9[%c0_348, %c0_349] : memref<2x32xf32, #tpu.memory_space<vmem>>, vector<2x32xf32>
    tpu.vector_store %arg9[%c0_348, %c0_349], %606 {strides = array<i32>} : memref<2x32xf32, #tpu.memory_space<vmem>>, vector<2x32xf32>,
    %c0_350 = arith.constant 0 : index
    %c0_351 = arith.constant 0 : index
    %659 = vector.load %arg7[%c0_350, %c0_351] : memref<2x32xf32, #tpu.memory_space<vmem>>, vector<2x32xf32>
    tpu.vector_store %arg7[%c0_350, %c0_351], %647 {strides = array<i32>} : memref<2x32xf32, #tpu.memory_space<vmem>>, vector<2x32xf32>,
    %c0_352 = arith.constant 0 : index
    %c0_353 = arith.constant 0 : index
    %660 = vector.load %arg11[%c0_352, %c0_353] : memref<2x32xf32, #tpu.memory_space<vmem>>, vector<2x32xf32>
    %cst_354 = arith.constant 0.951229453 : f32
    %661 = vector.broadcast %cst_354 : f32 to vector<2x32xf32>
    %662 = arith.mulf %661, %660 : vector<2x32xf32>
    %cst_355 = arith.constant 0.0487705767 : f32
    %663 = vector.broadcast %cst_355 : f32 to vector<2x32xf32>
    %664 = arith.mulf %663, %647 : vector<2x32xf32>
    %665 = arith.addf %662, %664 : vector<2x32xf32>
    %c0_356 = arith.constant 0 : index
    %c0_357 = arith.constant 0 : index
    %666 = vector.load %arg11[%c0_356, %c0_357] : memref<2x32xf32, #tpu.memory_space<vmem>>, vector<2x32xf32>
    tpu.vector_store %arg11[%c0_356, %c0_357], %665 {strides = array<i32>} : memref<2x32xf32, #tpu.memory_space<vmem>>, vector<2x32xf32>,
    %667 = vector.extract_strided_slice %450 {offsets = [0, 64], sizes = [2, 32], strides = [1, 1]} : vector<2x128xf32> to vector<2x32xf32>
    %c0_358 = arith.constant 0 : index
    %c0_359 = arith.constant 0 : index
    %668 = vector.load %arg7[%c0_358, %c0_359] : memref<2x32xf32, #tpu.memory_space<vmem>>, vector<2x32xf32>
    %c0_360 = arith.constant 0 : index
    %c0_361 = arith.constant 0 : index
    %669 = vector.load %arg6[%c0_360, %c0_361] : memref<2x128xf32, #tpu.memory_space<vmem>>, vector<2x128xf32>
    %670 = arith.truncf %668 : vector<2x32xf32> to vector<2x32xbf16>
    %cst_362 = arith.constant dense<0.000000e+00> : vector<2x128xf32>
    %671 = tpu.matmul %670, %3, %cst_362 {dimension_numbers = #tpu.dot_dimension_numbers<[1], [0], [0], [1], [0, 0, 1, 1], [], []>} : vector<2x32xbf16>, vector<32x128xbf16>, vector<2x128xf32> -> vector<2x128xf32>
    %672 = arith.addf %669, %671 : vector<2x128xf32>
    %673 = vector.extract_strided_slice %672 {offsets = [0, 0], sizes = [2, 32], strides = [1, 1]} : vector<2x128xf32> to vector<2x32xf32>
    %c96_i32_363 = arith.constant 96 : i32
    %674 = tpu.dynamic_rotate %672 by %c96_i32_363 dim 1 : vector<2x128xf32>, i32 -> vector<2x128xf32>
    %cst_364 = arith.constant 0.000000e+00 : f32
    %675 = vector.broadcast %cst_364 : f32 to vector<2x128xf32>
    %676 = arith.select %7, %674, %675 : vector<2x128xi1>, vector<2x128xf32>
    %c0_365 = arith.constant 0 : index
    %c0_366 = arith.constant 0 : index
    %677 = vector.load %arg6[%c0_365, %c0_366] : memref<2x128xf32, #tpu.memory_space<vmem>>, vector<2x128xf32>
    tpu.vector_store %arg6[%c0_365, %c0_366], %676 {strides = array<i32>} : memref<2x128xf32, #tpu.memory_space<vmem>>, vector<2x128xf32>,
    %678 = arith.addf %667, %673 : vector<2x32xf32>
    %c0_367 = arith.constant 0 : index
    %c0_368 = arith.constant 0 : index
    %679 = vector.load %arg8[%c0_367, %c0_368] : memref<2x32xf32, #tpu.memory_space<vmem>>, vector<2x32xf32>
    %c0_369 = arith.constant 0 : index
    %c0_370 = arith.constant 0 : index
    %680 = vector.load %arg9[%c0_369, %c0_370] : memref<2x32xf32, #tpu.memory_space<vmem>>, vector<2x32xf32>
    %c0_371 = arith.constant 0 : index
    %c0_372 = arith.constant 0 : index
    %681 = vector.load %arg10[%c0_371, %c0_372] : memref<2x32xf32, #tpu.memory_space<vmem>>, vector<2x32xf32>
    %cst_373 = arith.constant 1.000000e+00 : f32
    %682 = vector.broadcast %cst_373 : f32 to vector<2x32xf32>
    %683 = arith.subf %682, %668 : vector<2x32xf32>
    %684 = arith.mulf %683, %679 : vector<2x32xf32>
    %cst_374 = arith.constant 5.000000e-01 : f32
    %685 = vector.broadcast %cst_374 : f32 to vector<2x32xf32>
    %686 = arith.mulf %668, %685 : vector<2x32xf32>
    %687 = arith.addf %684, %686 : vector<2x32xf32>
    %cst_375 = arith.constant 5.000000e+00 : f32
    %688 = vector.broadcast %cst_375 : f32 to vector<2x32xf32>
    %689 = arith.mulf %688, %668 : vector<2x32xf32>
    %cst_376 = arith.constant 5.000000e+00 : f32
    %690 = vector.broadcast %cst_376 : f32 to vector<2x32xf32>
    %691 = arith.subf %690, %680 : vector<2x32xf32>
    %cst_377 = arith.constant 0.972999989 : f32
    %692 = vector.broadcast %cst_377 : f32 to vector<2x32xf32>
    %693 = arith.subf %689, %692 : vector<2x32xf32>
    %cst_378 = arith.constant 0.000000e+00 : f32
    %694 = vector.broadcast %cst_378 : f32 to vector<2x32xf32>
    %695 = arith.maximumf %693, %694 : vector<2x32xf32>
    %cst_379 = arith.constant 0.000000e+00 : f32
    %696 = vector.broadcast %cst_379 : f32 to vector<2x32xf32>
    %697 = arith.maximumf %691, %696 : vector<2x32xf32>
    %698 = arith.mulf %695, %697 : vector<2x32xf32>
    %cst_380 = arith.constant 5.000000e-01 : f32
    %699 = vector.broadcast %cst_380 : f32 to vector<2x32xf32>
    %700 = arith.mulf %699, %697 : vector<2x32xf32>
    %701 = arith.mulf %700, %697 : vector<2x32xf32>
    %702 = arith.subf %698, %701 : vector<2x32xf32>
    %cst_381 = arith.constant 7.200000e-05 : f32
    %703 = vector.broadcast %cst_381 : f32 to vector<2x32xf32>
    %704 = arith.mulf %703, %702 : vector<2x32xf32>
    %cst_382 = arith.constant 3.600000e-05 : f32
    %705 = vector.broadcast %cst_382 : f32 to vector<2x32xf32>
    %706 = arith.mulf %705, %695 : vector<2x32xf32>
    %707 = arith.mulf %706, %695 : vector<2x32xf32>
    %708 = arith.cmpf olt, %697, %695 : vector<2x32xf32>
    %709 = arith.select %708, %704, %707 : vector<2x32xi1>, vector<2x32xf32>
    %cst_383 = arith.constant 0.998572468 : f32
    %710 = vector.broadcast %cst_383 : f32 to vector<2x32xf32>
    %711 = arith.mulf %710, %680 : vector<2x32xf32>
    %cst_384 = arith.constant 142.755157 : f32
    %712 = vector.broadcast %cst_384 : f32 to vector<2x32xf32>
    %713 = arith.mulf %712, %709 : vector<2x32xf32>
    %714 = arith.addf %711, %713 : vector<2x32xf32>
    %cst_385 = arith.constant 0.000000e+00 : f32
    %715 = vector.broadcast %cst_385 : f32 to vector<2x32xf32>
    %716 = arith.cmpf ogt, %681, %715 : vector<2x32xf32>
    %cst_386 = arith.constant 0.000000e+00 : f32
    %717 = vector.broadcast %cst_386 : f32 to vector<2x32xf32>
    %718 = arith.maximumf %678, %717 : vector<2x32xf32>
    %cst_387 = arith.constant 7.450000e-01 : f32
    %719 = vector.broadcast %cst_387 : f32 to vector<2x32xf32>
    %720 = arith.subf %714, %719 : vector<2x32xf32>
    %cst_388 = arith.constant 0.000000e+00 : f32
    %721 = vector.broadcast %cst_388 : f32 to vector<2x32xf32>
    %722 = arith.maximumf %720, %721 : vector<2x32xf32>
    %cst_389 = arith.constant 0.000000e+00 : f32
    %723 = vector.broadcast %cst_389 : f32 to vector<2x32xf32>
    %724 = arith.maximumf %687, %723 : vector<2x32xf32>
    %cst_390 = arith.constant 6.000000e+00 : f32
    %725 = vector.broadcast %cst_390 : f32 to vector<1x32xf32>
    %726 = arith.mulf %4, %725 : vector<1x32xf32>
    %727 = arith.mulf %722, %724 : vector<2x32xf32>
    %cst_391 = arith.constant 5.000000e-01 : f32
    %728 = vector.broadcast %cst_391 : f32 to vector<2x32xf32>
    %729 = arith.mulf %728, %724 : vector<2x32xf32>
    %730 = arith.mulf %729, %724 : vector<2x32xf32>
    %731 = arith.subf %727, %730 : vector<2x32xf32>
    %732 = vector.broadcast %726 : vector<1x32xf32> to vector<2x32xf32>
    %733 = arith.mulf %732, %731 : vector<2x32xf32>
    %cst_392 = arith.constant 5.000000e-01 : f32
    %734 = vector.broadcast %cst_392 : f32 to vector<1x32xf32>
    %735 = arith.mulf %734, %4 : vector<1x32xf32>
    %cst_393 = arith.constant 6.000000e+00 : f32
    %736 = vector.broadcast %cst_393 : f32 to vector<1x32xf32>
    %737 = arith.mulf %735, %736 : vector<1x32xf32>
    %738 = vector.broadcast %737 : vector<1x32xf32> to vector<2x32xf32>
    %739 = arith.mulf %738, %722 : vector<2x32xf32>
    %740 = arith.mulf %739, %722 : vector<2x32xf32>
    %741 = arith.cmpf olt, %724, %722 : vector<2x32xf32>
    %742 = arith.select %741, %733, %740 : vector<2x32xi1>, vector<2x32xf32>
    %cst_394 = arith.constant 0.951932549 : f32
    %743 = vector.broadcast %cst_394 : f32 to vector<2x32xf32>
    %744 = arith.mulf %743, %687 : vector<2x32xf32>
    %745 = arith.subf %718, %742 : vector<2x32xf32>
    %cst_395 = arith.constant 4878.84473 : f32
    %746 = vector.broadcast %cst_395 : f32 to vector<2x32xf32>
    %747 = arith.mulf %746, %745 : vector<2x32xf32>
    %748 = arith.addf %744, %747 : vector<2x32xf32>
    %749 = arith.select %716, %687, %748 : vector<2x32xi1>, vector<2x32xf32>
    %cst_396 = arith.constant 2.000000e+00 : f32
    %750 = vector.broadcast %cst_396 : f32 to vector<2x32xf32>
    %751 = arith.cmpf oge, %749, %750 : vector<2x32xf32>
    %752 = arith.extui %751 : vector<2x32xi1> to vector<2x32xi32>
    %753 = arith.sitofp %752 : vector<2x32xi32> to vector<2x32xf32>
    %cst_397 = arith.constant 0.000000e+00 : f32
    %754 = vector.broadcast %cst_397 : f32 to vector<2x32xf32>
    %755 = arith.select %716, %754, %753 : vector<2x32xi1>, vector<2x32xf32>
    %cst_398 = arith.constant 0.000000e+00 : f32
    %756 = vector.broadcast %cst_398 : f32 to vector<2x32xf32>
    %757 = arith.cmpf ogt, %755, %756 : vector<2x32xf32>
    %cst_399 = arith.constant 1.000000e+00 : f32
    %758 = vector.broadcast %cst_399 : f32 to vector<2x32xf32>
    %759 = arith.subf %681, %758 : vector<2x32xf32>
    %cst_400 = arith.constant 0.000000e+00 : f32
    %760 = vector.broadcast %cst_400 : f32 to vector<2x32xf32>
    %761 = arith.maximumf %759, %760 : vector<2x32xf32>
    %cst_401 = arith.constant 3.000000e+00 : f32
    %762 = vector.broadcast %cst_401 : f32 to vector<2x32xf32>
    %763 = arith.select %757, %762, %761 : vector<2x32xi1>, vector<2x32xf32>
    %c0_402 = arith.constant 0 : index
    %c0_403 = arith.constant 0 : index
    %764 = vector.load %arg10[%c0_402, %c0_403] : memref<2x32xf32, #tpu.memory_space<vmem>>, vector<2x32xf32>
    tpu.vector_store %arg10[%c0_402, %c0_403], %763 {strides = array<i32>} : memref<2x32xf32, #tpu.memory_space<vmem>>, vector<2x32xf32>,
    %c0_404 = arith.constant 0 : index
    %c0_405 = arith.constant 0 : index
    %765 = vector.load %arg8[%c0_404, %c0_405] : memref<2x32xf32, #tpu.memory_space<vmem>>, vector<2x32xf32>
    tpu.vector_store %arg8[%c0_404, %c0_405], %749 {strides = array<i32>} : memref<2x32xf32, #tpu.memory_space<vmem>>, vector<2x32xf32>,
    %c0_406 = arith.constant 0 : index
    %c0_407 = arith.constant 0 : index
    %766 = vector.load %arg9[%c0_406, %c0_407] : memref<2x32xf32, #tpu.memory_space<vmem>>, vector<2x32xf32>
    tpu.vector_store %arg9[%c0_406, %c0_407], %714 {strides = array<i32>} : memref<2x32xf32, #tpu.memory_space<vmem>>, vector<2x32xf32>,
    %c0_408 = arith.constant 0 : index
    %c0_409 = arith.constant 0 : index
    %767 = vector.load %arg7[%c0_408, %c0_409] : memref<2x32xf32, #tpu.memory_space<vmem>>, vector<2x32xf32>
    tpu.vector_store %arg7[%c0_408, %c0_409], %755 {strides = array<i32>} : memref<2x32xf32, #tpu.memory_space<vmem>>, vector<2x32xf32>,
    %c0_410 = arith.constant 0 : index
    %c0_411 = arith.constant 0 : index
    %768 = vector.load %arg11[%c0_410, %c0_411] : memref<2x32xf32, #tpu.memory_space<vmem>>, vector<2x32xf32>
    %cst_412 = arith.constant 0.951229453 : f32
    %769 = vector.broadcast %cst_412 : f32 to vector<2x32xf32>
    %770 = arith.mulf %769, %768 : vector<2x32xf32>
    %cst_413 = arith.constant 0.0487705767 : f32
    %771 = vector.broadcast %cst_413 : f32 to vector<2x32xf32>
    %772 = arith.mulf %771, %755 : vector<2x32xf32>
    %773 = arith.addf %770, %772 : vector<2x32xf32>
    %c0_414 = arith.constant 0 : index
    %c0_415 = arith.constant 0 : index
    %774 = vector.load %arg11[%c0_414, %c0_415] : memref<2x32xf32, #tpu.memory_space<vmem>>, vector<2x32xf32>
    tpu.vector_store %arg11[%c0_414, %c0_415], %773 {strides = array<i32>} : memref<2x32xf32, #tpu.memory_space<vmem>>, vector<2x32xf32>,
    %775 = vector.extract_strided_slice %450 {offsets = [0, 96], sizes = [2, 32], strides = [1, 1]} : vector<2x128xf32> to vector<2x32xf32>
    %c0_416 = arith.constant 0 : index
    %c0_417 = arith.constant 0 : index
    %776 = vector.load %arg7[%c0_416, %c0_417] : memref<2x32xf32, #tpu.memory_space<vmem>>, vector<2x32xf32>
    %c0_418 = arith.constant 0 : index
    %c0_419 = arith.constant 0 : index
    %777 = vector.load %arg6[%c0_418, %c0_419] : memref<2x128xf32, #tpu.memory_space<vmem>>, vector<2x128xf32>
    %778 = arith.truncf %776 : vector<2x32xf32> to vector<2x32xbf16>
    %cst_420 = arith.constant dense<0.000000e+00> : vector<2x128xf32>
    %779 = tpu.matmul %778, %3, %cst_420 {dimension_numbers = #tpu.dot_dimension_numbers<[1], [0], [0], [1], [0, 0, 1, 1], [], []>} : vector<2x32xbf16>, vector<32x128xbf16>, vector<2x128xf32> -> vector<2x128xf32>
    %780 = arith.addf %777, %779 : vector<2x128xf32>
    %781 = vector.extract_strided_slice %780 {offsets = [0, 0], sizes = [2, 32], strides = [1, 1]} : vector<2x128xf32> to vector<2x32xf32>
    %c96_i32_421 = arith.constant 96 : i32
    %782 = tpu.dynamic_rotate %780 by %c96_i32_421 dim 1 : vector<2x128xf32>, i32 -> vector<2x128xf32>
    %cst_422 = arith.constant 0.000000e+00 : f32
    %783 = vector.broadcast %cst_422 : f32 to vector<2x128xf32>
    %784 = arith.select %7, %782, %783 : vector<2x128xi1>, vector<2x128xf32>
    %c0_423 = arith.constant 0 : index
    %c0_424 = arith.constant 0 : index
    %785 = vector.load %arg6[%c0_423, %c0_424] : memref<2x128xf32, #tpu.memory_space<vmem>>, vector<2x128xf32>
    tpu.vector_store %arg6[%c0_423, %c0_424], %784 {strides = array<i32>} : memref<2x128xf32, #tpu.memory_space<vmem>>, vector<2x128xf32>,
    %786 = arith.addf %775, %781 : vector<2x32xf32>
    %c0_425 = arith.constant 0 : index
    %c0_426 = arith.constant 0 : index
    %787 = vector.load %arg8[%c0_425, %c0_426] : memref<2x32xf32, #tpu.memory_space<vmem>>, vector<2x32xf32>
    %c0_427 = arith.constant 0 : index
    %c0_428 = arith.constant 0 : index
    %788 = vector.load %arg9[%c0_427, %c0_428] : memref<2x32xf32, #tpu.memory_space<vmem>>, vector<2x32xf32>
    %c0_429 = arith.constant 0 : index
    %c0_430 = arith.constant 0 : index
    %789 = vector.load %arg10[%c0_429, %c0_430] : memref<2x32xf32, #tpu.memory_space<vmem>>, vector<2x32xf32>
    %cst_431 = arith.constant 1.000000e+00 : f32
    %790 = vector.broadcast %cst_431 : f32 to vector<2x32xf32>
    %791 = arith.subf %790, %776 : vector<2x32xf32>
    %792 = arith.mulf %791, %787 : vector<2x32xf32>
    %cst_432 = arith.constant 5.000000e-01 : f32
    %793 = vector.broadcast %cst_432 : f32 to vector<2x32xf32>
    %794 = arith.mulf %776, %793 : vector<2x32xf32>
    %795 = arith.addf %792, %794 : vector<2x32xf32>
    %cst_433 = arith.constant 5.000000e+00 : f32
    %796 = vector.broadcast %cst_433 : f32 to vector<2x32xf32>
    %797 = arith.mulf %796, %776 : vector<2x32xf32>
    %cst_434 = arith.constant 5.000000e+00 : f32
    %798 = vector.broadcast %cst_434 : f32 to vector<2x32xf32>
    %799 = arith.subf %798, %788 : vector<2x32xf32>
    %cst_435 = arith.constant 0.972999989 : f32
    %800 = vector.broadcast %cst_435 : f32 to vector<2x32xf32>
    %801 = arith.subf %797, %800 : vector<2x32xf32>
    %cst_436 = arith.constant 0.000000e+00 : f32
    %802 = vector.broadcast %cst_436 : f32 to vector<2x32xf32>
    %803 = arith.maximumf %801, %802 : vector<2x32xf32>
    %cst_437 = arith.constant 0.000000e+00 : f32
    %804 = vector.broadcast %cst_437 : f32 to vector<2x32xf32>
    %805 = arith.maximumf %799, %804 : vector<2x32xf32>
    %806 = arith.mulf %803, %805 : vector<2x32xf32>
    %cst_438 = arith.constant 5.000000e-01 : f32
    %807 = vector.broadcast %cst_438 : f32 to vector<2x32xf32>
    %808 = arith.mulf %807, %805 : vector<2x32xf32>
    %809 = arith.mulf %808, %805 : vector<2x32xf32>
    %810 = arith.subf %806, %809 : vector<2x32xf32>
    %cst_439 = arith.constant 7.200000e-05 : f32
    %811 = vector.broadcast %cst_439 : f32 to vector<2x32xf32>
    %812 = arith.mulf %811, %810 : vector<2x32xf32>
    %cst_440 = arith.constant 3.600000e-05 : f32
    %813 = vector.broadcast %cst_440 : f32 to vector<2x32xf32>
    %814 = arith.mulf %813, %803 : vector<2x32xf32>
    %815 = arith.mulf %814, %803 : vector<2x32xf32>
    %816 = arith.cmpf olt, %805, %803 : vector<2x32xf32>
    %817 = arith.select %816, %812, %815 : vector<2x32xi1>, vector<2x32xf32>
    %cst_441 = arith.constant 0.998572468 : f32
    %818 = vector.broadcast %cst_441 : f32 to vector<2x32xf32>
    %819 = arith.mulf %818, %788 : vector<2x32xf32>
    %cst_442 = arith.constant 142.755157 : f32
    %820 = vector.broadcast %cst_442 : f32 to vector<2x32xf32>
    %821 = arith.mulf %820, %817 : vector<2x32xf32>
    %822 = arith.addf %819, %821 : vector<2x32xf32>
    %cst_443 = arith.constant 0.000000e+00 : f32
    %823 = vector.broadcast %cst_443 : f32 to vector<2x32xf32>
    %824 = arith.cmpf ogt, %789, %823 : vector<2x32xf32>
    %cst_444 = arith.constant 0.000000e+00 : f32
    %825 = vector.broadcast %cst_444 : f32 to vector<2x32xf32>
    %826 = arith.maximumf %786, %825 : vector<2x32xf32>
    %cst_445 = arith.constant 7.450000e-01 : f32
    %827 = vector.broadcast %cst_445 : f32 to vector<2x32xf32>
    %828 = arith.subf %822, %827 : vector<2x32xf32>
    %cst_446 = arith.constant 0.000000e+00 : f32
    %829 = vector.broadcast %cst_446 : f32 to vector<2x32xf32>
    %830 = arith.maximumf %828, %829 : vector<2x32xf32>
    %cst_447 = arith.constant 0.000000e+00 : f32
    %831 = vector.broadcast %cst_447 : f32 to vector<2x32xf32>
    %832 = arith.maximumf %795, %831 : vector<2x32xf32>
    %cst_448 = arith.constant 6.000000e+00 : f32
    %833 = vector.broadcast %cst_448 : f32 to vector<1x32xf32>
    %834 = arith.mulf %4, %833 : vector<1x32xf32>
    %835 = arith.mulf %830, %832 : vector<2x32xf32>
    %cst_449 = arith.constant 5.000000e-01 : f32
    %836 = vector.broadcast %cst_449 : f32 to vector<2x32xf32>
    %837 = arith.mulf %836, %832 : vector<2x32xf32>
    %838 = arith.mulf %837, %832 : vector<2x32xf32>
    %839 = arith.subf %835, %838 : vector<2x32xf32>
    %840 = vector.broadcast %834 : vector<1x32xf32> to vector<2x32xf32>
    %841 = arith.mulf %840, %839 : vector<2x32xf32>
    %cst_450 = arith.constant 5.000000e-01 : f32
    %842 = vector.broadcast %cst_450 : f32 to vector<1x32xf32>
    %843 = arith.mulf %842, %4 : vector<1x32xf32>
    %cst_451 = arith.constant 6.000000e+00 : f32
    %844 = vector.broadcast %cst_451 : f32 to vector<1x32xf32>
    %845 = arith.mulf %843, %844 : vector<1x32xf32>
    %846 = vector.broadcast %845 : vector<1x32xf32> to vector<2x32xf32>
    %847 = arith.mulf %846, %830 : vector<2x32xf32>
    %848 = arith.mulf %847, %830 : vector<2x32xf32>
    %849 = arith.cmpf olt, %832, %830 : vector<2x32xf32>
    %850 = arith.select %849, %841, %848 : vector<2x32xi1>, vector<2x32xf32>
    %cst_452 = arith.constant 0.951932549 : f32
    %851 = vector.broadcast %cst_452 : f32 to vector<2x32xf32>
    %852 = arith.mulf %851, %795 : vector<2x32xf32>
    %853 = arith.subf %826, %850 : vector<2x32xf32>
    %cst_453 = arith.constant 4878.84473 : f32
    %854 = vector.broadcast %cst_453 : f32 to vector<2x32xf32>
    %855 = arith.mulf %854, %853 : vector<2x32xf32>
    %856 = arith.addf %852, %855 : vector<2x32xf32>
    %857 = arith.select %824, %795, %856 : vector<2x32xi1>, vector<2x32xf32>
    %cst_454 = arith.constant 2.000000e+00 : f32
    %858 = vector.broadcast %cst_454 : f32 to vector<2x32xf32>
    %859 = arith.cmpf oge, %857, %858 : vector<2x32xf32>
    %860 = arith.extui %859 : vector<2x32xi1> to vector<2x32xi32>
    %861 = arith.sitofp %860 : vector<2x32xi32> to vector<2x32xf32>
    %cst_455 = arith.constant 0.000000e+00 : f32
    %862 = vector.broadcast %cst_455 : f32 to vector<2x32xf32>
    %863 = arith.select %824, %862, %861 : vector<2x32xi1>, vector<2x32xf32>
    %cst_456 = arith.constant 0.000000e+00 : f32
    %864 = vector.broadcast %cst_456 : f32 to vector<2x32xf32>
    %865 = arith.cmpf ogt, %863, %864 : vector<2x32xf32>
    %cst_457 = arith.constant 1.000000e+00 : f32
    %866 = vector.broadcast %cst_457 : f32 to vector<2x32xf32>
    %867 = arith.subf %789, %866 : vector<2x32xf32>
    %cst_458 = arith.constant 0.000000e+00 : f32
    %868 = vector.broadcast %cst_458 : f32 to vector<2x32xf32>
    %869 = arith.maximumf %867, %868 : vector<2x32xf32>
    %cst_459 = arith.constant 3.000000e+00 : f32
    %870 = vector.broadcast %cst_459 : f32 to vector<2x32xf32>
    %871 = arith.select %865, %870, %869 : vector<2x32xi1>, vector<2x32xf32>
    %c0_460 = arith.constant 0 : index
    %c0_461 = arith.constant 0 : index
    %872 = vector.load %arg10[%c0_460, %c0_461] : memref<2x32xf32, #tpu.memory_space<vmem>>, vector<2x32xf32>
    tpu.vector_store %arg10[%c0_460, %c0_461], %871 {strides = array<i32>} : memref<2x32xf32, #tpu.memory_space<vmem>>, vector<2x32xf32>,
    %c0_462 = arith.constant 0 : index
    %c0_463 = arith.constant 0 : index
    %873 = vector.load %arg8[%c0_462, %c0_463] : memref<2x32xf32, #tpu.memory_space<vmem>>, vector<2x32xf32>
    tpu.vector_store %arg8[%c0_462, %c0_463], %857 {strides = array<i32>} : memref<2x32xf32, #tpu.memory_space<vmem>>, vector<2x32xf32>,
    %c0_464 = arith.constant 0 : index
    %c0_465 = arith.constant 0 : index
    %874 = vector.load %arg9[%c0_464, %c0_465] : memref<2x32xf32, #tpu.memory_space<vmem>>, vector<2x32xf32>
    tpu.vector_store %arg9[%c0_464, %c0_465], %822 {strides = array<i32>} : memref<2x32xf32, #tpu.memory_space<vmem>>, vector<2x32xf32>,
    %c0_466 = arith.constant 0 : index
    %c0_467 = arith.constant 0 : index
    %875 = vector.load %arg7[%c0_466, %c0_467] : memref<2x32xf32, #tpu.memory_space<vmem>>, vector<2x32xf32>
    tpu.vector_store %arg7[%c0_466, %c0_467], %863 {strides = array<i32>} : memref<2x32xf32, #tpu.memory_space<vmem>>, vector<2x32xf32>,
    %c0_468 = arith.constant 0 : index
    %c0_469 = arith.constant 0 : index
    %876 = vector.load %arg11[%c0_468, %c0_469] : memref<2x32xf32, #tpu.memory_space<vmem>>, vector<2x32xf32>
    %cst_470 = arith.constant 0.951229453 : f32
    %877 = vector.broadcast %cst_470 : f32 to vector<2x32xf32>
    %878 = arith.mulf %877, %876 : vector<2x32xf32>
    %cst_471 = arith.constant 0.0487705767 : f32
    %879 = vector.broadcast %cst_471 : f32 to vector<2x32xf32>
    %880 = arith.mulf %879, %863 : vector<2x32xf32>
    %881 = arith.addf %878, %880 : vector<2x32xf32>
    %c0_472 = arith.constant 0 : index
    %c0_473 = arith.constant 0 : index
    %882 = vector.load %arg11[%c0_472, %c0_473] : memref<2x32xf32, #tpu.memory_space<vmem>>, vector<2x32xf32>
    tpu.vector_store %arg11[%c0_472, %c0_473], %881 {strides = array<i32>} : memref<2x32xf32, #tpu.memory_space<vmem>>, vector<2x32xf32>,
    %883 = tpu.concatenate %557, %665, %773, %881 in 1 : vector<2x32xf32>, vector<2x32xf32>, vector<2x32xf32>, vector<2x32xf32> -> vector<2x128xf32>
    %884 = arith.index_cast %c1_i32 : i32 to index
    %c0_474 = arith.constant 0 : index
    %c0_475 = arith.constant 0 : index
    %885 = vector.load %arg5[%884, %c0_474, %c0_475] : memref<2x2x128xf32, #tpu.memory_space<vmem>>, vector<1x2x128xf32>
    %886 = vector.shape_cast %885 : vector<1x2x128xf32> to vector<2x128xf32>
    %887 = vector.shape_cast %883 : vector<2x128xf32> to vector<1x2x128xf32>
    tpu.vector_store %arg5[%884, %c0_474, %c0_475], %887 {strides = array<i32>} : memref<2x2x128xf32, #tpu.memory_space<vmem>>, vector<1x2x128xf32>,
    %c2_i32 = arith.constant 2 : i32
    return
  }
  func.func @transform_0(%arg0: i32, %arg1: i32) -> (i32, i32, i32) {
    %c0_i32 = arith.constant 0 : i32
    %c0_i32_0 = arith.constant 0 : i32
    return %arg1, %arg0, %c0_i32 : i32, i32, i32
  }
  func.func @transform_1(%arg0: i32, %arg1: i32) -> (i32, i32) {
    %c0_i32 = arith.constant 0 : i32
    %c0_i32_0 = arith.constant 0 : i32
    %c0_i32_1 = arith.constant 0 : i32
    return %c0_i32, %c0_i32_0 : i32, i32
  }
  func.func @transform_2(%arg0: i32, %arg1: i32) -> (i32, i32) {
    %c0_i32 = arith.constant 0 : i32
    %c0_i32_0 = arith.constant 0 : i32
    %c0_i32_1 = arith.constant 0 : i32
    return %c0_i32, %c0_i32_0 : i32, i32
  }
  func.func @transform_3(%arg0: i32, %arg1: i32) -> (i32, i32, i32) {
    %c0_i32 = arith.constant 0 : i32
    %c0_i32_0 = arith.constant 0 : i32
    return %arg1, %arg0, %c0_i32 : i32, i32, i32
  }
}

</mosaic_0001>

<llo_original>
// kernel: tpu_custom_call.1
$region0: #{tpu_custom_call.1}
  #allocation0 [shape = 'u32[]', space=smem, size = 0x4, offset = 0x4, fixed_abs, tag = 'smem constant byte address 0x4 - core index']
  #allocation1 [shape = 'u32[144,128]{1,0:T(1,128)}', space=vmem, size = 0x12000, scoped, tag = 'internal scratch']
  #allocation2 [shape = 'f32[2,128]{1,0:T(2,128)}', space=vmem, size = 0x400, scoped, tag = 'scratch operand']
  #allocation3 [shape = 'f32[2,32]{1,0:T(2,128)}', space=vmem, size = 0x400, scoped, tag = 'scratch operand']
  #allocation4 [shape = 'f32[2,32]{1,0:T(2,128)}', space=vmem, size = 0x400, scoped, tag = 'scratch operand']
  #allocation5 [shape = 'f32[2,32]{1,0:T(2,128)}', space=vmem, size = 0x400, scoped, tag = 'scratch operand']
  #allocation6 [shape = 'f32[2,32]{1,0:T(2,128)}', space=vmem, size = 0x400, scoped, tag = 'scratch operand']
  #allocation7 [shape = 'f32[2,32]{1,0:T(2,128)}', space=vmem, size = 0x400, scoped, tag = 'scratch operand']
  %s0 = inlined_call_operand.hbm [shape: f32[2,2,128], index: 0, kind: input, shape index: {}]
  %s1 = inlined_call_operand.hbm [shape: bf16[32,128], index: 1, kind: input, shape index: {}]
  %s2 = inlined_call_operand.vmem [shape: f32[1,32], index: 2, kind: input, shape index: {}]
  %s3 = inlined_call_operand.hbm [shape: f32[2,2,128], index: 3, kind: output, shape index: {}]
  %s4 = sld [smem:[#allocation0]]
  $region34: #{tpu_custom_call.1} parent=0
    _
  %s6 = ssub.s32 1, %s4
  %s7 = scalar_select 0, %s6, %s4
  $region1: #{tpu_custom_call.1} parent=0
    #allocation8 [shape = 'u8[2048]{0}', space=vmem, size = 0x800, scoped, tag = 'input window, operand 0, single buffered']
    #allocation9 [shape = 's32[1]{0}', space=sflag, size = 0x4, scoped, tag = 'scoped memory for tpu_custom_call.1']
    #allocation10 [shape = 's32[1]{0}', space=sflag, size = 0x4, scoped, tag = 'scoped memory for tpu_custom_call.1']
    #allocation11 [shape = 'u8[8192]{0}', space=vmem, size = 0x2000, scoped, tag = 'input window, operand 1, single buffered']
    #allocation12 [shape = 's32[1]{0}', space=sflag, size = 0x4, scoped, tag = 'scoped memory for tpu_custom_call.1']
    #allocation13 [shape = 'u8[2048]{0}', space=vmem, size = 0x800, scoped, tag = 'output window, operand 0, single buffered']
    %8 = vsyncpa [#allocation9], 0
    %9 = vsyncpa [#allocation12], 0
    %10 = vsyncpa [#allocation10], 0
    // Predicated region
    $region2: #{tpu_custom_call.1} parent=1 // pred_check
      _
    $region3: #{tpu_custom_call.1} parent=1 // pred_check_branch
      %12 = sbr.rel (0) target = $region5
    $region4: #{tpu_custom_call.1} parent=1 // pred_region
      %s14 = ssub.s32 64, 64
      %15 = vsyncadd [#allocation9], %s14
      %s16 = sshll.u32 [#allocation8], 4
      %s17 = int_to_ptr.vmem [resolvable:$true] %s16
      %22 = dma.hbm_to_vmem [thread:$0]  %s0, 64, %s17, [#allocation9], 32, 32, 2
    $region5: #{tpu_custom_call.1} parent=1 // pred_fallthru
      _
    // Predicated region
    $region6: #{tpu_custom_call.1} parent=1 // pred_check
      _
    $region7: #{tpu_custom_call.1} parent=1 // pred_check_branch
      %24 = sbr.rel (0) target = $region9
    $region8: #{tpu_custom_call.1} parent=1 // pred_region
      %s26 = ssub.s32 256, 256
      %27 = vsyncadd [#allocation12], %s26
      %s28 = sshll.u32 [#allocation11], 4
      %s29 = int_to_ptr.vmem [resolvable:$true] %s28
      %34 = dma.hbm_to_vmem [thread:$0]  %s1, 256, %s29, [#allocation12], 64, 64, 4
    $region9: #{tpu_custom_call.1} parent=1 // pred_fallthru
      _
    // Predicated region
    $region10: #{tpu_custom_call.1} parent=1 // pred_check
      _
    $region11: #{tpu_custom_call.1} parent=1 // pred_check_branch
      %36 = sbr.rel (0) target = $region13
    $region12: #{tpu_custom_call.1} parent=1 // pred_region
      _
    $region13: #{tpu_custom_call.1} parent=1 // pred_fallthru
      _
    // Predicated region
    $region14: #{tpu_custom_call.1} parent=1 // pred_check
      _
    $region15: #{tpu_custom_call.1} parent=1 // pred_check_branch
      %38 = sbr.rel (0) target = $region17
    $region16: #{tpu_custom_call.1} parent=1 // pred_region
      %39 = dma.done [#allocation9], 64
    $region17: #{tpu_custom_call.1} parent=1 // pred_fallthru
      _
    // Predicated region
    $region18: #{tpu_custom_call.1} parent=1 // pred_check
      _
    $region19: #{tpu_custom_call.1} parent=1 // pred_check_branch
      %41 = sbr.rel (0) target = $region21
    $region20: #{tpu_custom_call.1} parent=1 // pred_region
      %42 = dma.done [#allocation12], 256
    $region21: #{tpu_custom_call.1} parent=1 // pred_fallthru
      _
    %p44 = scmp.eq.s32.totalorder 0, 0
    // Predicated region
    $region22: #{tpu_custom_call.1} parent=1 // pred_check
      %p45 = pneg %p44
    $region23: #{tpu_custom_call.1} parent=1 // pred_check_branch
      %47 = sbr.rel (%p45) target = $region25
    $region24: #{tpu_custom_call.1} parent=1 // pred_region
      %48 = vst [vmem:[#allocation2] sm:$0x3] 0.0
      %vm49 = vcmask 254976
      %50 = vst.msk [vmem:[#allocation3] sm:$0x3] %vm49, 0.0
      %51 = vst.msk [vmem:[#allocation4] sm:$0x3] %vm49, 0.0
      %52 = vst.msk [vmem:[#allocation5] sm:$0x3] %vm49, 0.0
      %53 = vst.msk [vmem:[#allocation6] sm:$0x3] %vm49, 0.0
      %54 = vst.msk [vmem:[#allocation7] sm:$0x3] %vm49, 0.0
    $region25: #{tpu_custom_call.1} parent=1 // pred_fallthru
      _
    %v55 = vld [vmem:[#allocation11] sm:$0xf]
    %v56 = vld [vmem:[#allocation11 + $0x4] sm:$0xf]
    %v57 = vld [vmem:[#allocation11 + $0x8] sm:$0xf]
    %v58 = vld [vmem:[#allocation11 + $0xc] sm:$0xf]
    %v59 = vld [vmem:[%s2] sm:$0x1]
    %v60 = vlaneseq
    %v61 = vand.u32 %v60, 127
    %vm62 = vcmp.lt.s32.totalorder %v61, 96
    %v63 = vld [vmem:[#allocation8] sm:$0x3]
    %v64 = vld [vmem:[#allocation3] sm:$0x3]
    %v65 = vld [vmem:[#allocation2] sm:$0x3]
    %v66 = vpack.c.bf16 %v64, %v64
    %v71 = vunpack.c.l.b16 %v55
    %v72 = vunpack.c.l.b16 %v56
    %v73 = vunpack.c.l.b16 %v57
    %v74 = vunpack.c.l.b16 %v58
    %v75 = vpack.c.b16 %v72, %v71
    %v76 = vpack.c.b16 %v74, %v73
    %vm79 = vcmask 261120
    %v81 = vsel %vm79, %v66, 0
    %83 = vmatprep.subr.bf16.mxu0 0
    %84 = vmatpush1.bf16.msra.mxu0 %v75
    %85 = vmatprep.subr.bf16.mxu0 0
    %86 = vmatpush1.bf16.msra.mxu0 %v76
    %87 = vmatprep.subr.bf16.mxu0 0
    %88 = vmatpush1.bf16.msra.mxu0 0
    %89 = vmatprep.subr.bf16.mxu0 0
    %90 = vmatpush1.bf16.msra.mxu0 0
    %91 = vmatprep.subr.bf16.mxu0 0
    %92 = vmatpush1.bf16.msra.mxu0 0
    %93 = vmatprep.subr.bf16.mxu0 0
    %94 = vmatpush1.bf16.msra.mxu0 0
    %95 = vmatprep.subr.bf16.mxu0 0
    %96 = vmatpush1.bf16.msra.mxu0 0
    %97 = vmatprep.subr.bf16.mxu0 0
    %98 = vmatpush1.bf16.msra.mxu0 0
    %99 = vmatprep.subr.bf16.mxu0 0
    %100 = vmatpush1.bf16.msra.mxu0 0
    %101 = vmatprep.subr.bf16.mxu0 0
    %102 = vmatpush1.bf16.msra.mxu0 0
    %103 = vmatprep.subr.bf16.mxu0 0
    %104 = vmatpush1.bf16.msra.mxu0 0
    %105 = vmatprep.subr.bf16.mxu0 0
    %106 = vmatpush1.bf16.msra.mxu0 0
    %107 = vmatprep.subr.bf16.mxu0 0
    %108 = vmatpush1.bf16.msra.mxu0 0
    %109 = vmatprep.subr.bf16.mxu0 0
    %110 = vmatpush1.bf16.msra.mxu0 0
    %111 = vmatprep.subr.bf16.mxu0 0
    %112 = vmatpush1.bf16.msra.mxu0 0
    %113 = vmatprep.subr.bf16.mxu0 0
    %114 = vmatpush1.bf16.msra.mxu0 0
    %115 = vmatprep.mubr.bf16.mxu0 0
    %116 = vmatmul.mubr.bf16.gmra.mrb[0].mxu0 %v81
    %v117 = vpop.f32.mrb[0].mxu0
    %v118 = vadd.f32 0.0, %v117
    %v119 = vpop.f32.mrb[0].mxu0
    %v120 = vpop.f32.mrb[0].mxu0
    %v121 = vpop.f32.mrb[0].mxu0
    %122 = vdwg.mxu0
    %v123 = vadd.f32 %v65, %v118
    %124 = vrot.lane.b32.xlu0 %v123, 96
    %v125 = vpop.permute.xlu0 %124
    %v126 = vsel %vm62, %v125, 0.0
    %127 = vst [vmem:[#allocation2] sm:$0x3] %v126
    %v128 = vadd.f32 %v63, %v123
    %v129 = vld [vmem:[#allocation4] sm:$0x3]
    %v130 = vld [vmem:[#allocation5] sm:$0x3]
    %v131 = vld [vmem:[#allocation6] sm:$0x3]
    %v132 = vsub.f32 1.0, %v64
    %v133 = vmul.f32 %v132, %v129
    %v134 = vmul.f32 %v64, 0.5
    %v135 = vadd.f32 %v133, %v134
    %v136 = vmul.f32 %v64, 5.0
    %v137 = vsub.f32 5.0, %v130
    %v138 = vsub.f32 %v136, 0.973
    %v139 = vmax.f32 %v138, 0.0
    %v140 = vmax.f32 %v137, 0.0
    %v141 = vmul.f32 %v139, %v140
    %v142 = vmul.f32 %v140, 0.5
    %v143 = vmul.f32 %v142, %v140
    %v144 = vsub.f32 %v141, %v143
    %v145 = vmul.f32 %v144, 7.2e-05
    %v146 = vmul.f32 %v139, 3.6e-05
    %v147 = vmul.f32 %v146, %v139
    %vm148 = vcmp.lt.f32.partialorder %v140, %v139
    %v149 = vsel %vm148, %v145, %v147
    %v150 = vmul.f32 %v130, 0.99857247
    %v151 = vmul.f32 %v149, 142.75516
    %v152 = vadd.f32 %v150, %v151
    %vm153 = vcmp.gt.f32.partialorder %v131, 0.0
    %v154 = vmax.f32 %v128, 0.0
    %v155 = vsub.f32 %v152, 0.745
    %v156 = vmax.f32 %v155, 0.0
    %v157 = vmax.f32 %v135, 0.0
    %v158 = vmul.f32 %v59, 6.0
    %v159 = vmul.f32 %v156, %v157
    %v160 = vmul.f32 %v157, 0.5
    %v161 = vmul.f32 %v160, %v157
    %v162 = vsub.f32 %v159, %v161
    %v164 = vlaneseq
    %v165 = vshrl.u32 %v164, 7
    %v166 = vsub.s32 0, %v165
    %v167 = vrot.slane %v158, %v166
    %v169 = vmul.f32 %v167, %v162
    %v170 = vmul.f32 %v59, 0.5
    %v171 = vmul.f32 %v170, 6.0
    %v173 = vlaneseq
    %v174 = vshrl.u32 %v173, 7
    %v175 = vsub.s32 0, %v174
    %v176 = vrot.slane %v171, %v175
    %v178 = vmul.f32 %v176, %v156
    %v179 = vmul.f32 %v178, %v156
    %vm180 = vcmp.lt.f32.partialorder %v157, %v156
    %v181 = vsel %vm180, %v169, %v179
    %v182 = vmul.f32 %v135, 0.95193255
    %v183 = vsub.f32 %v154, %v181
    %v184 = vmul.f32 %v183, 4878.8447
    %v185 = vadd.f32 %v182, %v184
    %v186 = vsel %vm153, %v135, %v185
    %vm187 = vcmp.ge.f32.partialorder %v186, 2.0
    %v188 = vsel %vm187, 1, 0
    %v189 = vcvt.s32.f32 %v188
    %v190 = vsel %vm153, 0.0, %v189
    %vm191 = vcmp.gt.f32.partialorder %v190, 0.0
    %v192 = vsub.f32 %v131, 1.0
    %v193 = vmax.f32 %v192, 0.0
    %v194 = vsel %vm191, 3.0, %v193
    %vm195 = vcmask 254976
    %196 = vst.msk [vmem:[#allocation6] sm:$0x3] %vm195, %v194
    %197 = vst.msk [vmem:[#allocation4] sm:$0x3] %vm195, %v186
    %198 = vst.msk [vmem:[#allocation5] sm:$0x3] %vm195, %v152
    %199 = vst.msk [vmem:[#allocation3] sm:$0x3] %vm195, %v190
    %v200 = vld [vmem:[#allocation7] sm:$0x3]
    %v201 = vmul.f32 %v200, 0.95122945
    %v202 = vmul.f32 %v190, 0.048770577
    %v203 = vadd.f32 %v201, %v202
    %204 = vst.msk [vmem:[#allocation7] sm:$0x3] %vm195, %v203
    %v205 = vld [vmem:[#allocation3] sm:$0x3]
    %v206 = vld [vmem:[#allocation2] sm:$0x3]
    %v207 = vpack.c.bf16 %v205, %v205
    %v209 = vsel %vm79, %v207, 0
    %211 = vmatprep.subr.bf16.mxu0 0
    %212 = vmatpush1.bf16.msra.mxu0 %v75
    %213 = vmatprep.subr.bf16.mxu0 0
    %214 = vmatpush1.bf16.msra.mxu0 %v76
    %215 = vmatprep.subr.bf16.mxu0 0
    %216 = vmatpush1.bf16.msra.mxu0 0
    %217 = vmatprep.subr.bf16.mxu0 0
    %218 = vmatpush1.bf16.msra.mxu0 0
    %219 = vmatprep.subr.bf16.mxu0 0
    %220 = vmatpush1.bf16.msra.mxu0 0
    %221 = vmatprep.subr.bf16.mxu0 0
    %222 = vmatpush1.bf16.msra.mxu0 0
    %223 = vmatprep.subr.bf16.mxu0 0
    %224 = vmatpush1.bf16.msra.mxu0 0
    %225 = vmatprep.subr.bf16.mxu0 0
    %226 = vmatpush1.bf16.msra.mxu0 0
    %227 = vmatprep.subr.bf16.mxu0 0
    %228 = vmatpush1.bf16.msra.mxu0 0
    %229 = vmatprep.subr.bf16.mxu0 0
    %230 = vmatpush1.bf16.msra.mxu0 0
    %231 = vmatprep.subr.bf16.mxu0 0
    %232 = vmatpush1.bf16.msra.mxu0 0
    %233 = vmatprep.subr.bf16.mxu0 0
    %234 = vmatpush1.bf16.msra.mxu0 0
    %235 = vmatprep.subr.bf16.mxu0 0
    %236 = vmatpush1.bf16.msra.mxu0 0
    %237 = vmatprep.subr.bf16.mxu0 0
    %238 = vmatpush1.bf16.msra.mxu0 0
    %239 = vmatprep.subr.bf16.mxu0 0
    %240 = vmatpush1.bf16.msra.mxu0 0
    %241 = vmatprep.subr.bf16.mxu0 0
    %242 = vmatpush1.bf16.msra.mxu0 0
    %243 = vmatprep.mubr.bf16.mxu0 0
    %244 = vmatmul.mubr.bf16.gmra.mrb[0].mxu0 %v209
    %v245 = vpop.f32.mrb[0].mxu0
    %v246 = vadd.f32 0.0, %v245
    %v247 = vpop.f32.mrb[0].mxu0
    %v248 = vpop.f32.mrb[0].mxu0
    %v249 = vpop.f32.mrb[0].mxu0
    %250 = vdwg.mxu0
    %v251 = vadd.f32 %v206, %v246
    %252 = vrot.lane.b32.xlu0 %v251, 96
    %v253 = vpop.permute.xlu0 %252
    %v254 = vsel %vm62, %v253, 0.0
    %255 = vst [vmem:[#allocation2] sm:$0x3] %v254
    %257 = vrot.lane.b32.xlu0 %v251, 32
    %v258 = vpop.permute.xlu0 %257
    %v260 = vadd.f32 %v63, %v258
    %v261 = vld [vmem:[#allocation4] sm:$0x3]
    %v262 = vld [vmem:[#allocation5] sm:$0x3]
    %v263 = vld [vmem:[#allocation6] sm:$0x3]
    %v264 = vsub.f32 1.0, %v205
    %v265 = vmul.f32 %v264, %v261
    %v266 = vmul.f32 %v205, 0.5
    %v267 = vadd.f32 %v265, %v266
    %v268 = vmul.f32 %v205, 5.0
    %v269 = vsub.f32 5.0, %v262
    %v270 = vsub.f32 %v268, 0.973
    %v271 = vmax.f32 %v270, 0.0
    %v272 = vmax.f32 %v269, 0.0
    %v273 = vmul.f32 %v271, %v272
    %v274 = vmul.f32 %v272, 0.5
    %v275 = vmul.f32 %v274, %v272
    %v276 = vsub.f32 %v273, %v275
    %v277 = vmul.f32 %v276, 7.2e-05
    %v278 = vmul.f32 %v271, 3.6e-05
    %v279 = vmul.f32 %v278, %v271
    %vm280 = vcmp.lt.f32.partialorder %v272, %v271
    %v281 = vsel %vm280, %v277, %v279
    %v282 = vmul.f32 %v262, 0.99857247
    %v283 = vmul.f32 %v281, 142.75516
    %v284 = vadd.f32 %v282, %v283
    %vm285 = vcmp.gt.f32.partialorder %v263, 0.0
    %v286 = vmax.f32 %v260, 0.0
    %v287 = vsub.f32 %v284, 0.745
    %v288 = vmax.f32 %v287, 0.0
    %v289 = vmax.f32 %v267, 0.0
    %v290 = vmul.f32 %v288, %v289
    %v291 = vmul.f32 %v289, 0.5
    %v292 = vmul.f32 %v291, %v289
    %v293 = vsub.f32 %v290, %v292
    %v294 = vmul.f32 %v167, %v293
    %v295 = vmul.f32 %v176, %v288
    %v296 = vmul.f32 %v295, %v288
    %vm297 = vcmp.lt.f32.partialorder %v289, %v288
    %v298 = vsel %vm297, %v294, %v296
    %v299 = vmul.f32 %v267, 0.95193255
    %301 = vrot.lane.b32.xlu0 %v298, 32
    %v302 = vpop.permute.xlu0 %301
    %v304 = vsub.f32 %v286, %v302
    %v305 = vmul.f32 %v304, 4878.8447
    %307 = vrot.lane.b32.xlu0 %v305, 96
    %v308 = vpop.permute.xlu0 %307
    %v310 = vadd.f32 %v299, %v308
    %v311 = vsel %vm285, %v267, %v310
    %vm312 = vcmp.ge.f32.partialorder %v311, 2.0
    %v313 = vsel %vm312, 1, 0
    %v314 = vcvt.s32.f32 %v313
    %v315 = vsel %vm285, 0.0, %v314
    %vm316 = vcmp.gt.f32.partialorder %v315, 0.0
    %v317 = vsub.f32 %v263, 1.0
    %v318 = vmax.f32 %v317, 0.0
    %v319 = vsel %vm316, 3.0, %v318
    %320 = vst.msk [vmem:[#allocation6] sm:$0x3] %vm195, %v319
    %321 = vst.msk [vmem:[#allocation4] sm:$0x3] %vm195, %v311
    %322 = vst.msk [vmem:[#allocation5] sm:$0x3] %vm195, %v284
    %323 = vst.msk [vmem:[#allocation3] sm:$0x3] %vm195, %v315
    %v324 = vld [vmem:[#allocation7] sm:$0x3]
    %v325 = vmul.f32 %v324, 0.95122945
    %v326 = vmul.f32 %v315, 0.048770577
    %v327 = vadd.f32 %v325, %v326
    %328 = vst.msk [vmem:[#allocation7] sm:$0x3] %vm195, %v327
    %v329 = vld [vmem:[#allocation3] sm:$0x3]
    %v330 = vld [vmem:[#allocation2] sm:$0x3]
    %v331 = vpack.c.bf16 %v329, %v329
    %v333 = vsel %vm79, %v331, 0
    %335 = vmatprep.subr.bf16.mxu0 0
    %336 = vmatpush1.bf16.msra.mxu0 %v75
    %337 = vmatprep.subr.bf16.mxu0 0
    %338 = vmatpush1.bf16.msra.mxu0 %v76
    %339 = vmatprep.subr.bf16.mxu0 0
    %340 = vmatpush1.bf16.msra.mxu0 0
    %341 = vmatprep.subr.bf16.mxu0 0
    %342 = vmatpush1.bf16.msra.mxu0 0
    %343 = vmatprep.subr.bf16.mxu0 0
    %344 = vmatpush1.bf16.msra.mxu0 0
    %345 = vmatprep.subr.bf16.mxu0 0
    %346 = vmatpush1.bf16.msra.mxu0 0
    %347 = vmatprep.subr.bf16.mxu0 0
    %348 = vmatpush1.bf16.msra.mxu0 0
    %349 = vmatprep.subr.bf16.mxu0 0
    %350 = vmatpush1.bf16.msra.mxu0 0
    %351 = vmatprep.subr.bf16.mxu0 0
    %352 = vmatpush1.bf16.msra.mxu0 0
    %353 = vmatprep.subr.bf16.mxu0 0
    %354 = vmatpush1.bf16.msra.mxu0 0
    %355 = vmatprep.subr.bf16.mxu0 0
    %356 = vmatpush1.bf16.msra.mxu0 0
    %357 = vmatprep.subr.bf16.mxu0 0
    %358 = vmatpush1.bf16.msra.mxu0 0
    %359 = vmatprep.subr.bf16.mxu0 0
    %360 = vmatpush1.bf16.msra.mxu0 0
    %361 = vmatprep.subr.bf16.mxu0 0
    %362 = vmatpush1.bf16.msra.mxu0 0
    %363 = vmatprep.subr.bf16.mxu0 0
    %364 = vmatpush1.bf16.msra.mxu0 0
    %365 = vmatprep.subr.bf16.mxu0 0
    %366 = vmatpush1.bf16.msra.mxu0 0
    %367 = vmatprep.mubr.bf16.mxu0 0
    %368 = vmatmul.mubr.bf16.gmra.mrb[0].mxu0 %v333
    %v369 = vpop.f32.mrb[0].mxu0
    %v370 = vadd.f32 0.0, %v369
    %v371 = vpop.f32.mrb[0].mxu0
    %v372 = vpop.f32.mrb[0].mxu0
    %v373 = vpop.f32.mrb[0].mxu0
    %374 = vdwg.mxu0
    %v375 = vadd.f32 %v330, %v370
    %376 = vrot.lane.b32.xlu0 %v375, 96
    %v377 = vpop.permute.xlu0 %376
    %v378 = vsel %vm62, %v377, 0.0
    %379 = vst [vmem:[#allocation2] sm:$0x3] %v378
    %381 = vrot.lane.b32.xlu0 %v375, 64
    %v382 = vpop.permute.xlu0 %381
    %v384 = vadd.f32 %v63, %v382
    %v385 = vld [vmem:[#allocation4] sm:$0x3]
    %v386 = vld [vmem:[#allocation5] sm:$0x3]
    %v387 = vld [vmem:[#allocation6] sm:$0x3]
    %v388 = vsub.f32 1.0, %v329
    %v389 = vmul.f32 %v388, %v385
    %v390 = vmul.f32 %v329, 0.5
    %v391 = vadd.f32 %v389, %v390
    %v392 = vmul.f32 %v329, 5.0
    %v393 = vsub.f32 5.0, %v386
    %v394 = vsub.f32 %v392, 0.973
    %v395 = vmax.f32 %v394, 0.0
    %v396 = vmax.f32 %v393, 0.0
    %v397 = vmul.f32 %v395, %v396
    %v398 = vmul.f32 %v396, 0.5
    %v399 = vmul.f32 %v398, %v396
    %v400 = vsub.f32 %v397, %v399
    %v401 = vmul.f32 %v400, 7.2e-05
    %v402 = vmul.f32 %v395, 3.6e-05
    %v403 = vmul.f32 %v402, %v395
    %vm404 = vcmp.lt.f32.partialorder %v396, %v395
    %v405 = vsel %vm404, %v401, %v403
    %v406 = vmul.f32 %v386, 0.99857247
    %v407 = vmul.f32 %v405, 142.75516
    %v408 = vadd.f32 %v406, %v407
    %vm409 = vcmp.gt.f32.partialorder %v387, 0.0
    %v410 = vmax.f32 %v384, 0.0
    %v411 = vsub.f32 %v408, 0.745
    %v412 = vmax.f32 %v411, 0.0
    %v413 = vmax.f32 %v391, 0.0
    %v414 = vmul.f32 %v412, %v413
    %v415 = vmul.f32 %v413, 0.5
    %v416 = vmul.f32 %v415, %v413
    %v417 = vsub.f32 %v414, %v416
    %v418 = vmul.f32 %v167, %v417
    %v419 = vmul.f32 %v176, %v412
    %v420 = vmul.f32 %v419, %v412
    %vm421 = vcmp.lt.f32.partialorder %v413, %v412
    %v422 = vsel %vm421, %v418, %v420
    %v423 = vmul.f32 %v391, 0.95193255
    %425 = vrot.lane.b32.xlu0 %v422, 64
    %v426 = vpop.permute.xlu0 %425
    %v428 = vsub.f32 %v410, %v426
    %v429 = vmul.f32 %v428, 4878.8447
    %431 = vrot.lane.b32.xlu0 %v429, 64
    %v432 = vpop.permute.xlu0 %431
    %v434 = vadd.f32 %v423, %v432
    %v435 = vsel %vm409, %v391, %v434
    %vm436 = vcmp.ge.f32.partialorder %v435, 2.0
    %v437 = vsel %vm436, 1, 0
    %v438 = vcvt.s32.f32 %v437
    %v439 = vsel %vm409, 0.0, %v438
    %vm440 = vcmp.gt.f32.partialorder %v439, 0.0
    %v441 = vsub.f32 %v387, 1.0
    %v442 = vmax.f32 %v441, 0.0
    %v443 = vsel %vm440, 3.0, %v442
    %444 = vst.msk [vmem:[#allocation6] sm:$0x3] %vm195, %v443
    %445 = vst.msk [vmem:[#allocation4] sm:$0x3] %vm195, %v435
    %446 = vst.msk [vmem:[#allocation5] sm:$0x3] %vm195, %v408
    %447 = vst.msk [vmem:[#allocation3] sm:$0x3] %vm195, %v439
    %v448 = vld [vmem:[#allocation7] sm:$0x3]
    %v449 = vmul.f32 %v448, 0.95122945
    %v450 = vmul.f32 %v439, 0.048770577
    %v451 = vadd.f32 %v449, %v450
    %452 = vst.msk [vmem:[#allocation7] sm:$0x3] %vm195, %v451
    %v453 = vld [vmem:[#allocation3] sm:$0x3]
    %v454 = vld [vmem:[#allocation2] sm:$0x3]
    %v455 = vpack.c.bf16 %v453, %v453
    %v457 = vsel %vm79, %v455, 0
    %459 = vmatprep.subr.bf16.mxu0 0
    %460 = vmatpush1.bf16.msra.mxu0 %v75
    %461 = vmatprep.subr.bf16.mxu0 0
    %462 = vmatpush1.bf16.msra.mxu0 %v76
    %463 = vmatprep.subr.bf16.mxu0 0
    %464 = vmatpush1.bf16.msra.mxu0 0
    %465 = vmatprep.subr.bf16.mxu0 0
    %466 = vmatpush1.bf16.msra.mxu0 0
    %467 = vmatprep.subr.bf16.mxu0 0
    %468 = vmatpush1.bf16.msra.mxu0 0
    %469 = vmatprep.subr.bf16.mxu0 0
    %470 = vmatpush1.bf16.msra.mxu0 0
    %471 = vmatprep.subr.bf16.mxu0 0
    %472 = vmatpush1.bf16.msra.mxu0 0
    %473 = vmatprep.subr.bf16.mxu0 0
    %474 = vmatpush1.bf16.msra.mxu0 0
    %475 = vmatprep.subr.bf16.mxu0 0
    %476 = vmatpush1.bf16.msra.mxu0 0
    %477 = vmatprep.subr.bf16.mxu0 0
    %478 = vmatpush1.bf16.msra.mxu0 0
    %479 = vmatprep.subr.bf16.mxu0 0
    %480 = vmatpush1.bf16.msra.mxu0 0
    %481 = vmatprep.subr.bf16.mxu0 0
    %482 = vmatpush1.bf16.msra.mxu0 0
    %483 = vmatprep.subr.bf16.mxu0 0
    %484 = vmatpush1.bf16.msra.mxu0 0
    %485 = vmatprep.subr.bf16.mxu0 0
    %486 = vmatpush1.bf16.msra.mxu0 0
    %487 = vmatprep.subr.bf16.mxu0 0
    %488 = vmatpush1.bf16.msra.mxu0 0
    %489 = vmatprep.subr.bf16.mxu0 0
    %490 = vmatpush1.bf16.msra.mxu0 0
    %491 = vmatprep.mubr.bf16.mxu0 0
    %492 = vmatmul.mubr.bf16.gmra.mrb[0].mxu0 %v457
    %v493 = vpop.f32.mrb[0].mxu0
    %v494 = vadd.f32 0.0, %v493
    %v495 = vpop.f32.mrb[0].mxu0
    %v496 = vpop.f32.mrb[0].mxu0
    %v497 = vpop.f32.mrb[0].mxu0
    %498 = vdwg.mxu0
    %v499 = vadd.f32 %v454, %v494
    %500 = vrot.lane.b32.xlu0 %v499, 96
    %v501 = vpop.permute.xlu0 %500
    %v502 = vsel %vm62, %v501, 0.0
    %503 = vst [vmem:[#allocation2] sm:$0x3] %v502
    %505 = vrot.lane.b32.xlu0 %v499, 96
    %v506 = vpop.permute.xlu0 %505
    %v508 = vadd.f32 %v63, %v506
    %v509 = vld [vmem:[#allocation4] sm:$0x3]
    %v510 = vld [vmem:[#allocation5] sm:$0x3]
    %v511 = vld [vmem:[#allocation6] sm:$0x3]
    %v512 = vsub.f32 1.0, %v453
    %v513 = vmul.f32 %v512, %v509
    %v514 = vmul.f32 %v453, 0.5
    %v515 = vadd.f32 %v513, %v514
    %v516 = vmul.f32 %v453, 5.0
    %v517 = vsub.f32 5.0, %v510
    %v518 = vsub.f32 %v516, 0.973
    %v519 = vmax.f32 %v518, 0.0
    %v520 = vmax.f32 %v517, 0.0
    %v521 = vmul.f32 %v519, %v520
    %v522 = vmul.f32 %v520, 0.5
    %v523 = vmul.f32 %v522, %v520
    %v524 = vsub.f32 %v521, %v523
    %v525 = vmul.f32 %v524, 7.2e-05
    %v526 = vmul.f32 %v519, 3.6e-05
    %v527 = vmul.f32 %v526, %v519
    %vm528 = vcmp.lt.f32.partialorder %v520, %v519
    %v529 = vsel %vm528, %v525, %v527
    %v530 = vmul.f32 %v510, 0.99857247
    %v531 = vmul.f32 %v529, 142.75516
    %v532 = vadd.f32 %v530, %v531
    %vm533 = vcmp.gt.f32.partialorder %v511, 0.0
    %v534 = vmax.f32 %v508, 0.0
    %v535 = vsub.f32 %v532, 0.745
    %v536 = vmax.f32 %v535, 0.0
    %v537 = vmax.f32 %v515, 0.0
    %v538 = vmul.f32 %v536, %v537
    %v539 = vmul.f32 %v537, 0.5
    %v540 = vmul.f32 %v539, %v537
    %v541 = vsub.f32 %v538, %v540
    %v542 = vmul.f32 %v167, %v541
    %v543 = vmul.f32 %v176, %v536
    %v544 = vmul.f32 %v543, %v536
    %vm545 = vcmp.lt.f32.partialorder %v537, %v536
    %v546 = vsel %vm545, %v542, %v544
    %v547 = vmul.f32 %v515, 0.95193255
    %549 = vrot.lane.b32.xlu0 %v546, 96
    %v550 = vpop.permute.xlu0 %549
    %v552 = vsub.f32 %v534, %v550
    %v553 = vmul.f32 %v552, 4878.8447
    %555 = vrot.lane.b32.xlu0 %v553, 32
    %v556 = vpop.permute.xlu0 %555
    %v558 = vadd.f32 %v547, %v556
    %v559 = vsel %vm533, %v515, %v558
    %vm560 = vcmp.ge.f32.partialorder %v559, 2.0
    %v561 = vsel %vm560, 1, 0
    %v562 = vcvt.s32.f32 %v561
    %v563 = vsel %vm533, 0.0, %v562
    %vm564 = vcmp.gt.f32.partialorder %v563, 0.0
    %v565 = vsub.f32 %v511, 1.0
    %v566 = vmax.f32 %v565, 0.0
    %v567 = vsel %vm564, 3.0, %v566
    %568 = vst.msk [vmem:[#allocation6] sm:$0x3] %vm195, %v567
    %569 = vst.msk [vmem:[#allocation4] sm:$0x3] %vm195, %v559
    %570 = vst.msk [vmem:[#allocation5] sm:$0x3] %vm195, %v532
    %571 = vst.msk [vmem:[#allocation3] sm:$0x3] %vm195, %v563
    %v572 = vld [vmem:[#allocation7] sm:$0x3]
    %v573 = vmul.f32 %v572, 0.95122945
    %v574 = vmul.f32 %v563, 0.048770577
    %v575 = vadd.f32 %v573, %v574
    %576 = vst.msk [vmem:[#allocation7] sm:$0x3] %vm195, %v575
    %578 = vrot.lane.b32.xlu0 %v327, 32
    %v579 = vpop.permute.xlu0 %578
    %582 = vrot.lane.b32.xlu0 %v451, 64
    %v583 = vpop.permute.xlu0 %582
    %586 = vrot.lane.b32.xlu0 %v575, 96
    %v587 = vpop.permute.xlu0 %586
    %v589 = vsel %vm79, %v203, %v579
    %vm590 = vcmask 523264
    %v591 = vsel %vm590, %v589, %v583
    %vm592 = vcmask 785408
    %v593 = vsel %vm592, %v591, %v587
    %594 = vst [vmem:[#allocation13] sm:$0x3] %v593
    %s595 = scalar_lea.vmem [#allocation8], 2
    %v596 = vld [vmem:[%s595] sm:$0x3]
    %v597 = vld [vmem:[#allocation3] sm:$0x3]
    %v598 = vld [vmem:[#allocation2] sm:$0x3]
    %v599 = vpack.c.bf16 %v597, %v597
    %v601 = vsel %vm79, %v599, 0
    %603 = vmatprep.subr.bf16.mxu0 0
    %604 = vmatpush1.bf16.msra.mxu0 %v75
    %605 = vmatprep.subr.bf16.mxu0 0
    %606 = vmatpush1.bf16.msra.mxu0 %v76
    %607 = vmatprep.subr.bf16.mxu0 0
    %608 = vmatpush1.bf16.msra.mxu0 0
    %609 = vmatprep.subr.bf16.mxu0 0
    %610 = vmatpush1.bf16.msra.mxu0 0
    %611 = vmatprep.subr.bf16.mxu0 0
    %612 = vmatpush1.bf16.msra.mxu0 0
    %613 = vmatprep.subr.bf16.mxu0 0
    %614 = vmatpush1.bf16.msra.mxu0 0
    %615 = vmatprep.subr.bf16.mxu0 0
    %616 = vmatpush1.bf16.msra.mxu0 0
    %617 = vmatprep.subr.bf16.mxu0 0
    %618 = vmatpush1.bf16.msra.mxu0 0
    %619 = vmatprep.subr.bf16.mxu0 0
    %620 = vmatpush1.bf16.msra.mxu0 0
    %621 = vmatprep.subr.bf16.mxu0 0
    %622 = vmatpush1.bf16.msra.mxu0 0
    %623 = vmatprep.subr.bf16.mxu0 0
    %624 = vmatpush1.bf16.msra.mxu0 0
    %625 = vmatprep.subr.bf16.mxu0 0
    %626 = vmatpush1.bf16.msra.mxu0 0
    %627 = vmatprep.subr.bf16.mxu0 0
    %628 = vmatpush1.bf16.msra.mxu0 0
    %629 = vmatprep.subr.bf16.mxu0 0
    %630 = vmatpush1.bf16.msra.mxu0 0
    %631 = vmatprep.subr.bf16.mxu0 0
    %632 = vmatpush1.bf16.msra.mxu0 0
    %633 = vmatprep.subr.bf16.mxu0 0
    %634 = vmatpush1.bf16.msra.mxu0 0
    %635 = vmatprep.mubr.bf16.mxu0 0
    %636 = vmatmul.mubr.bf16.gmra.mrb[0].mxu0 %v601
    %v637 = vpop.f32.mrb[0].mxu0
    %v638 = vadd.f32 0.0, %v637
    %v639 = vpop.f32.mrb[0].mxu0
    %v640 = vpop.f32.mrb[0].mxu0
    %v641 = vpop.f32.mrb[0].mxu0
    %642 = vdwg.mxu0
    %v643 = vadd.f32 %v598, %v638
    %644 = vrot.lane.b32.xlu0 %v643, 96
    %v645 = vpop.permute.xlu0 %644
    %v646 = vsel %vm62, %v645, 0.0
    %647 = vst [vmem:[#allocation2] sm:$0x3] %v646
    %v648 = vadd.f32 %v596, %v643
    %v649 = vld [vmem:[#allocation4] sm:$0x3]
    %v650 = vld [vmem:[#allocation5] sm:$0x3]
    %v651 = vld [vmem:[#allocation6] sm:$0x3]
    %v652 = vsub.f32 1.0, %v597
    %v653 = vmul.f32 %v652, %v649
    %v654 = vmul.f32 %v597, 0.5
    %v655 = vadd.f32 %v653, %v654
    %v656 = vmul.f32 %v597, 5.0
    %v657 = vsub.f32 5.0, %v650
    %v658 = vsub.f32 %v656, 0.973
    %v659 = vmax.f32 %v658, 0.0
    %v660 = vmax.f32 %v657, 0.0
    %v661 = vmul.f32 %v659, %v660
    %v662 = vmul.f32 %v660, 0.5
    %v663 = vmul.f32 %v662, %v660
    %v664 = vsub.f32 %v661, %v663
    %v665 = vmul.f32 %v664, 7.2e-05
    %v666 = vmul.f32 %v659, 3.6e-05
    %v667 = vmul.f32 %v666, %v659
    %vm668 = vcmp.lt.f32.partialorder %v660, %v659
    %v669 = vsel %vm668, %v665, %v667
    %v670 = vmul.f32 %v650, 0.99857247
    %v671 = vmul.f32 %v669, 142.75516
    %v672 = vadd.f32 %v670, %v671
    %vm673 = vcmp.gt.f32.partialorder %v651, 0.0
    %v674 = vmax.f32 %v648, 0.0
    %v675 = vsub.f32 %v672, 0.745
    %v676 = vmax.f32 %v675, 0.0
    %v677 = vmax.f32 %v655, 0.0
    %v678 = vmul.f32 %v676, %v677
    %v679 = vmul.f32 %v677, 0.5
    %v680 = vmul.f32 %v679, %v677
    %v681 = vsub.f32 %v678, %v680
    %v682 = vmul.f32 %v167, %v681
    %v683 = vmul.f32 %v176, %v676
    %v684 = vmul.f32 %v683, %v676
    %vm685 = vcmp.lt.f32.partialorder %v677, %v676
    %v686 = vsel %vm685, %v682, %v684
    %v687 = vmul.f32 %v655, 0.95193255
    %v688 = vsub.f32 %v674, %v686
    %v689 = vmul.f32 %v688, 4878.8447
    %v690 = vadd.f32 %v687, %v689
    %v691 = vsel %vm673, %v655, %v690
    %vm692 = vcmp.ge.f32.partialorder %v691, 2.0
    %v693 = vsel %vm692, 1, 0
    %v694 = vcvt.s32.f32 %v693
    %v695 = vsel %vm673, 0.0, %v694
    %vm696 = vcmp.gt.f32.partialorder %v695, 0.0
    %v697 = vsub.f32 %v651, 1.0
    %v698 = vmax.f32 %v697, 0.0
    %v699 = vsel %vm696, 3.0, %v698
    %700 = vst.msk [vmem:[#allocation6] sm:$0x3] %vm195, %v699
    %701 = vst.msk [vmem:[#allocation4] sm:$0x3] %vm195, %v691
    %702 = vst.msk [vmem:[#allocation5] sm:$0x3] %vm195, %v672
    %703 = vst.msk [vmem:[#allocation3] sm:$0x3] %vm195, %v695
    %v704 = vld [vmem:[#allocation7] sm:$0x3]
    %v705 = vmul.f32 %v704, 0.95122945
    %v706 = vmul.f32 %v695, 0.048770577
    %v707 = vadd.f32 %v705, %v706
    %708 = vst.msk [vmem:[#allocation7] sm:$0x3] %vm195, %v707
    %v709 = vld [vmem:[#allocation3] sm:$0x3]
    %v710 = vld [vmem:[#allocation2] sm:$0x3]
    %v711 = vpack.c.bf16 %v709, %v709
    %v713 = vsel %vm79, %v711, 0
    %715 = vmatprep.subr.bf16.mxu0 0
    %716 = vmatpush1.bf16.msra.mxu0 %v75
    %717 = vmatprep.subr.bf16.mxu0 0
    %718 = vmatpush1.bf16.msra.mxu0 %v76
    %719 = vmatprep.subr.bf16.mxu0 0
    %720 = vmatpush1.bf16.msra.mxu0 0
    %721 = vmatprep.subr.bf16.mxu0 0
    %722 = vmatpush1.bf16.msra.mxu0 0
    %723 = vmatprep.subr.bf16.mxu0 0
    %724 = vmatpush1.bf16.msra.mxu0 0
    %725 = vmatprep.subr.bf16.mxu0 0
    %726 = vmatpush1.bf16.msra.mxu0 0
    %727 = vmatprep.subr.bf16.mxu0 0
    %728 = vmatpush1.bf16.msra.mxu0 0
    %729 = vmatprep.subr.bf16.mxu0 0
    %730 = vmatpush1.bf16.msra.mxu0 0
    %731 = vmatprep.subr.bf16.mxu0 0
    %732 = vmatpush1.bf16.msra.mxu0 0
    %733 = vmatprep.subr.bf16.mxu0 0
    %734 = vmatpush1.bf16.msra.mxu0 0
    %735 = vmatprep.subr.bf16.mxu0 0
    %736 = vmatpush1.bf16.msra.mxu0 0
    %737 = vmatprep.subr.bf16.mxu0 0
    %738 = vmatpush1.bf16.msra.mxu0 0
    %739 = vmatprep.subr.bf16.mxu0 0
    %740 = vmatpush1.bf16.msra.mxu0 0
    %741 = vmatprep.subr.bf16.mxu0 0
    %742 = vmatpush1.bf16.msra.mxu0 0
    %743 = vmatprep.subr.bf16.mxu0 0
    %744 = vmatpush1.bf16.msra.mxu0 0
    %745 = vmatprep.subr.bf16.mxu0 0
    %746 = vmatpush1.bf16.msra.mxu0 0
    %747 = vmatprep.mubr.bf16.mxu0 0
    %748 = vmatmul.mubr.bf16.gmra.mrb[0].mxu0 %v713
    %v749 = vpop.f32.mrb[0].mxu0
    %v750 = vadd.f32 0.0, %v749
    %v751 = vpop.f32.mrb[0].mxu0
    %v752 = vpop.f32.mrb[0].mxu0
    %v753 = vpop.f32.mrb[0].mxu0
    %754 = vdwg.mxu0
    %v755 = vadd.f32 %v710, %v750
    %756 = vrot.lane.b32.xlu0 %v755, 96
    %v757 = vpop.permute.xlu0 %756
    %v758 = vsel %vm62, %v757, 0.0
    %759 = vst [vmem:[#allocation2] sm:$0x3] %v758
    %761 = vrot.lane.b32.xlu0 %v755, 32
    %v762 = vpop.permute.xlu0 %761
    %v764 = vadd.f32 %v596, %v762
    %v765 = vld [vmem:[#allocation4] sm:$0x3]
    %v766 = vld [vmem:[#allocation5] sm:$0x3]
    %v767 = vld [vmem:[#allocation6] sm:$0x3]
    %v768 = vsub.f32 1.0, %v709
    %v769 = vmul.f32 %v768, %v765
    %v770 = vmul.f32 %v709, 0.5
    %v771 = vadd.f32 %v769, %v770
    %v772 = vmul.f32 %v709, 5.0
    %v773 = vsub.f32 5.0, %v766
    %v774 = vsub.f32 %v772, 0.973
    %v775 = vmax.f32 %v774, 0.0
    %v776 = vmax.f32 %v773, 0.0
    %v777 = vmul.f32 %v775, %v776
    %v778 = vmul.f32 %v776, 0.5
    %v779 = vmul.f32 %v778, %v776
    %v780 = vsub.f32 %v777, %v779
    %v781 = vmul.f32 %v780, 7.2e-05
    %v782 = vmul.f32 %v775, 3.6e-05
    %v783 = vmul.f32 %v782, %v775
    %vm784 = vcmp.lt.f32.partialorder %v776, %v775
    %v785 = vsel %vm784, %v781, %v783
    %v786 = vmul.f32 %v766, 0.99857247
    %v787 = vmul.f32 %v785, 142.75516
    %v788 = vadd.f32 %v786, %v787
    %vm789 = vcmp.gt.f32.partialorder %v767, 0.0
    %v790 = vmax.f32 %v764, 0.0
    %v791 = vsub.f32 %v788, 0.745
    %v792 = vmax.f32 %v791, 0.0
    %v793 = vmax.f32 %v771, 0.0
    %v794 = vmul.f32 %v792, %v793
    %v795 = vmul.f32 %v793, 0.5
    %v796 = vmul.f32 %v795, %v793
    %v797 = vsub.f32 %v794, %v796
    %v798 = vmul.f32 %v167, %v797
    %v799 = vmul.f32 %v176, %v792
    %v800 = vmul.f32 %v799, %v792
    %vm801 = vcmp.lt.f32.partialorder %v793, %v792
    %v802 = vsel %vm801, %v798, %v800
    %v803 = vmul.f32 %v771, 0.95193255
    %805 = vrot.lane.b32.xlu0 %v802, 32
    %v806 = vpop.permute.xlu0 %805
    %v808 = vsub.f32 %v790, %v806
    %v809 = vmul.f32 %v808, 4878.8447
    %811 = vrot.lane.b32.xlu0 %v809, 96
    %v812 = vpop.permute.xlu0 %811
    %v814 = vadd.f32 %v803, %v812
    %v815 = vsel %vm789, %v771, %v814
    %vm816 = vcmp.ge.f32.partialorder %v815, 2.0
    %v817 = vsel %vm816, 1, 0
    %v818 = vcvt.s32.f32 %v817
    %v819 = vsel %vm789, 0.0, %v818
    %vm820 = vcmp.gt.f32.partialorder %v819, 0.0
    %v821 = vsub.f32 %v767, 1.0
    %v822 = vmax.f32 %v821, 0.0
    %v823 = vsel %vm820, 3.0, %v822
    %824 = vst.msk [vmem:[#allocation6] sm:$0x3] %vm195, %v823
    %825 = vst.msk [vmem:[#allocation4] sm:$0x3] %vm195, %v815
    %826 = vst.msk [vmem:[#allocation5] sm:$0x3] %vm195, %v788
    %827 = vst.msk [vmem:[#allocation3] sm:$0x3] %vm195, %v819
    %v828 = vld [vmem:[#allocation7] sm:$0x3]
    %v829 = vmul.f32 %v828, 0.95122945
    %v830 = vmul.f32 %v819, 0.048770577
    %v831 = vadd.f32 %v829, %v830
    %832 = vst.msk [vmem:[#allocation7] sm:$0x3] %vm195, %v831
    %v833 = vld [vmem:[#allocation3] sm:$0x3]
    %v834 = vld [vmem:[#allocation2] sm:$0x3]
    %v835 = vpack.c.bf16 %v833, %v833
    %v837 = vsel %vm79, %v835, 0
    %839 = vmatprep.subr.bf16.mxu0 0
    %840 = vmatpush1.bf16.msra.mxu0 %v75
    %841 = vmatprep.subr.bf16.mxu0 0
    %842 = vmatpush1.bf16.msra.mxu0 %v76
    %843 = vmatprep.subr.bf16.mxu0 0
    %844 = vmatpush1.bf16.msra.mxu0 0
    %845 = vmatprep.subr.bf16.mxu0 0
    %846 = vmatpush1.bf16.msra.mxu0 0
    %847 = vmatprep.subr.bf16.mxu0 0
    %848 = vmatpush1.bf16.msra.mxu0 0
    %849 = vmatprep.subr.bf16.mxu0 0
    %850 = vmatpush1.bf16.msra.mxu0 0
    %851 = vmatprep.subr.bf16.mxu0 0
    %852 = vmatpush1.bf16.msra.mxu0 0
    %853 = vmatprep.subr.bf16.mxu0 0
    %854 = vmatpush1.bf16.msra.mxu0 0
    %855 = vmatprep.subr.bf16.mxu0 0
    %856 = vmatpush1.bf16.msra.mxu0 0
    %857 = vmatprep.subr.bf16.mxu0 0
    %858 = vmatpush1.bf16.msra.mxu0 0
    %859 = vmatprep.subr.bf16.mxu0 0
    %860 = vmatpush1.bf16.msra.mxu0 0
    %861 = vmatprep.subr.bf16.mxu0 0
    %862 = vmatpush1.bf16.msra.mxu0 0
    %863 = vmatprep.subr.bf16.mxu0 0
    %864 = vmatpush1.bf16.msra.mxu0 0
    %865 = vmatprep.subr.bf16.mxu0 0
    %866 = vmatpush1.bf16.msra.mxu0 0
    %867 = vmatprep.subr.bf16.mxu0 0
    %868 = vmatpush1.bf16.msra.mxu0 0
    %869 = vmatprep.subr.bf16.mxu0 0
    %870 = vmatpush1.bf16.msra.mxu0 0
    %871 = vmatprep.mubr.bf16.mxu0 0
    %872 = vmatmul.mubr.bf16.gmra.mrb[0].mxu0 %v837
    %v873 = vpop.f32.mrb[0].mxu0
    %v874 = vadd.f32 0.0, %v873
    %v875 = vpop.f32.mrb[0].mxu0
    %v876 = vpop.f32.mrb[0].mxu0
    %v877 = vpop.f32.mrb[0].mxu0
    %878 = vdwg.mxu0
    %v879 = vadd.f32 %v834, %v874
    %880 = vrot.lane.b32.xlu0 %v879, 96
    %v881 = vpop.permute.xlu0 %880
    %v882 = vsel %vm62, %v881, 0.0
    %883 = vst [vmem:[#allocation2] sm:$0x3] %v882
    %885 = vrot.lane.b32.xlu0 %v879, 64
    %v886 = vpop.permute.xlu0 %885
    %v888 = vadd.f32 %v596, %v886
    %v889 = vld [vmem:[#allocation4] sm:$0x3]
    %v890 = vld [vmem:[#allocation5] sm:$0x3]
    %v891 = vld [vmem:[#allocation6] sm:$0x3]
    %v892 = vsub.f32 1.0, %v833
    %v893 = vmul.f32 %v892, %v889
    %v894 = vmul.f32 %v833, 0.5
    %v895 = vadd.f32 %v893, %v894
    %v896 = vmul.f32 %v833, 5.0
    %v897 = vsub.f32 5.0, %v890
    %v898 = vsub.f32 %v896, 0.973
    %v899 = vmax.f32 %v898, 0.0
    %v900 = vmax.f32 %v897, 0.0
    %v901 = vmul.f32 %v899, %v900
    %v902 = vmul.f32 %v900, 0.5
    %v903 = vmul.f32 %v902, %v900
    %v904 = vsub.f32 %v901, %v903
    %v905 = vmul.f32 %v904, 7.2e-05
    %v906 = vmul.f32 %v899, 3.6e-05
    %v907 = vmul.f32 %v906, %v899
    %vm908 = vcmp.lt.f32.partialorder %v900, %v899
    %v909 = vsel %vm908, %v905, %v907
    %v910 = vmul.f32 %v890, 0.99857247
    %v911 = vmul.f32 %v909, 142.75516
    %v912 = vadd.f32 %v910, %v911
    %vm913 = vcmp.gt.f32.partialorder %v891, 0.0
    %v914 = vmax.f32 %v888, 0.0
    %v915 = vsub.f32 %v912, 0.745
    %v916 = vmax.f32 %v915, 0.0
    %v917 = vmax.f32 %v895, 0.0
    %v918 = vmul.f32 %v916, %v917
    %v919 = vmul.f32 %v917, 0.5
    %v920 = vmul.f32 %v919, %v917
    %v921 = vsub.f32 %v918, %v920
    %v922 = vmul.f32 %v167, %v921
    %v923 = vmul.f32 %v176, %v916
    %v924 = vmul.f32 %v923, %v916
    %vm925 = vcmp.lt.f32.partialorder %v917, %v916
    %v926 = vsel %vm925, %v922, %v924
    %v927 = vmul.f32 %v895, 0.95193255
    %929 = vrot.lane.b32.xlu0 %v926, 64
    %v930 = vpop.permute.xlu0 %929
    %v932 = vsub.f32 %v914, %v930
    %v933 = vmul.f32 %v932, 4878.8447
    %935 = vrot.lane.b32.xlu0 %v933, 64
    %v936 = vpop.permute.xlu0 %935
    %v938 = vadd.f32 %v927, %v936
    %v939 = vsel %vm913, %v895, %v938
    %vm940 = vcmp.ge.f32.partialorder %v939, 2.0
    %v941 = vsel %vm940, 1, 0
    %v942 = vcvt.s32.f32 %v941
    %v943 = vsel %vm913, 0.0, %v942
    %vm944 = vcmp.gt.f32.partialorder %v943, 0.0
    %v945 = vsub.f32 %v891, 1.0
    %v946 = vmax.f32 %v945, 0.0
    %v947 = vsel %vm944, 3.0, %v946
    %948 = vst.msk [vmem:[#allocation6] sm:$0x3] %vm195, %v947
    %949 = vst.msk [vmem:[#allocation4] sm:$0x3] %vm195, %v939
    %950 = vst.msk [vmem:[#allocation5] sm:$0x3] %vm195, %v912
    %951 = vst.msk [vmem:[#allocation3] sm:$0x3] %vm195, %v943
    %v952 = vld [vmem:[#allocation7] sm:$0x3]
    %v953 = vmul.f32 %v952, 0.95122945
    %v954 = vmul.f32 %v943, 0.048770577
    %v955 = vadd.f32 %v953, %v954
    %956 = vst.msk [vmem:[#allocation7] sm:$0x3] %vm195, %v955
    %v957 = vld [vmem:[#allocation3] sm:$0x3]
    %v958 = vld [vmem:[#allocation2] sm:$0x3]
    %v959 = vpack.c.bf16 %v957, %v957
    %v961 = vsel %vm79, %v959, 0
    %963 = vmatprep.subr.bf16.mxu0 0
    %964 = vmatpush1.bf16.msra.mxu0 %v75
    %965 = vmatprep.subr.bf16.mxu0 0
    %966 = vmatpush1.bf16.msra.mxu0 %v76
    %967 = vmatprep.subr.bf16.mxu0 0
    %968 = vmatpush1.bf16.msra.mxu0 0
    %969 = vmatprep.subr.bf16.mxu0 0
    %970 = vmatpush1.bf16.msra.mxu0 0
    %971 = vmatprep.subr.bf16.mxu0 0
    %972 = vmatpush1.bf16.msra.mxu0 0
    %973 = vmatprep.subr.bf16.mxu0 0
    %974 = vmatpush1.bf16.msra.mxu0 0
    %975 = vmatprep.subr.bf16.mxu0 0
    %976 = vmatpush1.bf16.msra.mxu0 0
    %977 = vmatprep.subr.bf16.mxu0 0
    %978 = vmatpush1.bf16.msra.mxu0 0
    %979 = vmatprep.subr.bf16.mxu0 0
    %980 = vmatpush1.bf16.msra.mxu0 0
    %981 = vmatprep.subr.bf16.mxu0 0
    %982 = vmatpush1.bf16.msra.mxu0 0
    %983 = vmatprep.subr.bf16.mxu0 0
    %984 = vmatpush1.bf16.msra.mxu0 0
    %985 = vmatprep.subr.bf16.mxu0 0
    %986 = vmatpush1.bf16.msra.mxu0 0
    %987 = vmatprep.subr.bf16.mxu0 0
    %988 = vmatpush1.bf16.msra.mxu0 0
    %989 = vmatprep.subr.bf16.mxu0 0
    %990 = vmatpush1.bf16.msra.mxu0 0
    %991 = vmatprep.subr.bf16.mxu0 0
    %992 = vmatpush1.bf16.msra.mxu0 0
    %993 = vmatprep.subr.bf16.mxu0 0
    %994 = vmatpush1.bf16.msra.mxu0 0
    %995 = vmatprep.mubr.bf16.mxu0 0
    %996 = vmatmul.mubr.bf16.gmra.mrb[0].mxu0 %v961
    %v997 = vpop.f32.mrb[0].mxu0
    %v998 = vadd.f32 0.0, %v997
    %v999 = vpop.f32.mrb[0].mxu0
    %v1000 = vpop.f32.mrb[0].mxu0
    %v1001 = vpop.f32.mrb[0].mxu0
    %1002 = vdwg.mxu0
    %v1003 = vadd.f32 %v958, %v998
    %1004 = vrot.lane.b32.xlu0 %v1003, 96
    %v1005 = vpop.permute.xlu0 %1004
    %v1006 = vsel %vm62, %v1005, 0.0
    %1007 = vst [vmem:[#allocation2] sm:$0x3] %v1006
    %1009 = vrot.lane.b32.xlu0 %v1003, 96
    %v1010 = vpop.permute.xlu0 %1009
    %v1012 = vadd.f32 %v596, %v1010
    %v1013 = vld [vmem:[#allocation4] sm:$0x3]
    %v1014 = vld [vmem:[#allocation5] sm:$0x3]
    %v1015 = vld [vmem:[#allocation6] sm:$0x3]
    %v1016 = vsub.f32 1.0, %v957
    %v1017 = vmul.f32 %v1016, %v1013
    %v1018 = vmul.f32 %v957, 0.5
    %v1019 = vadd.f32 %v1017, %v1018
    %v1020 = vmul.f32 %v957, 5.0
    %v1021 = vsub.f32 5.0, %v1014
    %v1022 = vsub.f32 %v1020, 0.973
    %v1023 = vmax.f32 %v1022, 0.0
    %v1024 = vmax.f32 %v1021, 0.0
    %v1025 = vmul.f32 %v1023, %v1024
    %v1026 = vmul.f32 %v1024, 0.5
    %v1027 = vmul.f32 %v1026, %v1024
    %v1028 = vsub.f32 %v1025, %v1027
    %v1029 = vmul.f32 %v1028, 7.2e-05
    %v1030 = vmul.f32 %v1023, 3.6e-05
    %v1031 = vmul.f32 %v1030, %v1023
    %vm1032 = vcmp.lt.f32.partialorder %v1024, %v1023
    %v1033 = vsel %vm1032, %v1029, %v1031
    %v1034 = vmul.f32 %v1014, 0.99857247
    %v1035 = vmul.f32 %v1033, 142.75516
    %v1036 = vadd.f32 %v1034, %v1035
    %vm1037 = vcmp.gt.f32.partialorder %v1015, 0.0
    %v1038 = vmax.f32 %v1012, 0.0
    %v1039 = vsub.f32 %v1036, 0.745
    %v1040 = vmax.f32 %v1039, 0.0
    %v1041 = vmax.f32 %v1019, 0.0
    %v1042 = vmul.f32 %v1040, %v1041
    %v1043 = vmul.f32 %v1041, 0.5
    %v1044 = vmul.f32 %v1043, %v1041
    %v1045 = vsub.f32 %v1042, %v1044
    %v1046 = vmul.f32 %v167, %v1045
    %v1047 = vmul.f32 %v176, %v1040
    %v1048 = vmul.f32 %v1047, %v1040
    %vm1049 = vcmp.lt.f32.partialorder %v1041, %v1040
    %v1050 = vsel %vm1049, %v1046, %v1048
    %v1051 = vmul.f32 %v1019, 0.95193255
    %1053 = vrot.lane.b32.xlu0 %v1050, 96
    %v1054 = vpop.permute.xlu0 %1053
    %v1056 = vsub.f32 %v1038, %v1054
    %v1057 = vmul.f32 %v1056, 4878.8447
    %1059 = vrot.lane.b32.xlu0 %v1057, 32
    %v1060 = vpop.permute.xlu0 %1059
    %v1062 = vadd.f32 %v1051, %v1060
    %v1063 = vsel %vm1037, %v1019, %v1062
    %vm1064 = vcmp.ge.f32.partialorder %v1063, 2.0
    %v1065 = vsel %vm1064, 1, 0
    %v1066 = vcvt.s32.f32 %v1065
    %v1067 = vsel %vm1037, 0.0, %v1066
    %vm1068 = vcmp.gt.f32.partialorder %v1067, 0.0
    %v1069 = vsub.f32 %v1015, 1.0
    %v1070 = vmax.f32 %v1069, 0.0
    %v1071 = vsel %vm1068, 3.0, %v1070
    %1072 = vst.msk [vmem:[#allocation6] sm:$0x3] %vm195, %v1071
    %1073 = vst.msk [vmem:[#allocation4] sm:$0x3] %vm195, %v1063
    %1074 = vst.msk [vmem:[#allocation5] sm:$0x3] %vm195, %v1036
    %1075 = vst.msk [vmem:[#allocation3] sm:$0x3] %vm195, %v1067
    %v1076 = vld [vmem:[#allocation7] sm:$0x3]
    %v1077 = vmul.f32 %v1076, 0.95122945
    %v1078 = vmul.f32 %v1067, 0.048770577
    %v1079 = vadd.f32 %v1077, %v1078
    %1080 = vst.msk [vmem:[#allocation7] sm:$0x3] %vm195, %v1079
    %1082 = vrot.lane.b32.xlu0 %v831, 32
    %v1083 = vpop.permute.xlu0 %1082
    %1086 = vrot.lane.b32.xlu0 %v955, 64
    %v1087 = vpop.permute.xlu0 %1086
    %1090 = vrot.lane.b32.xlu0 %v1079, 96
    %v1091 = vpop.permute.xlu0 %1090
    %v1093 = vsel %vm79, %v707, %v1083
    %v1094 = vsel %vm590, %v1093, %v1087
    %v1095 = vsel %vm592, %v1094, %v1091
    %s1096 = scalar_lea.vmem [#allocation13], 2
    %1097 = vst [vmem:[%s1096] sm:$0x3] %v1095
    // Predicated region
    $region26: #{tpu_custom_call.1} parent=1 // pred_check
      _
    $region27: #{tpu_custom_call.1} parent=1 // pred_check_branch
      %1099 = sbr.rel (0) target = $region29
    $region28: #{tpu_custom_call.1} parent=1 // pred_region
      %s1101 = ssub.s32 64, 64
      %1102 = vsyncadd [#allocation10], %s1101
      %s1103 = sshll.u32 [#allocation13], 4
      %s1104 = int_to_ptr.vmem [resolvable:$true] %s1103
      %1109 = dma.vmem_to_hbm [thread:$0]  %s1104, 64, %s3, [#allocation10], 32, 32, 2
    $region29: #{tpu_custom_call.1} parent=1 // pred_fallthru
      _
    // Predicated region
    $region30: #{tpu_custom_call.1} parent=1 // pred_check
      _
    $region31: #{tpu_custom_call.1} parent=1 // pred_check_branch
      %1111 = sbr.rel (0) target = $region33
    $region32: #{tpu_custom_call.1} parent=1 // pred_region
      %1112 = dma.done [#allocation10], 64
    $region33: #{tpu_custom_call.1} parent=1 // pred_fallthru
      _
    %1113 = vsyncpa [#allocation9], 1
    %1114 = vsyncpa [#allocation12], 1
    %1115 = vsyncpa [#allocation10], 1

</llo_original>
